<compile_context>
chip_gen: v6e
topology: v6e:2x2x1
jax: 0.10.0
libtpu: 0.0.40
codegen_flags: <defaults>
</compile_context>

<pallas_src>
import functools
import math

import jax
import jax.numpy as jnp
from jax import lax
from jax.experimental import pallas as pl
from jax.experimental.pallas import tpu as pltpu


# ---------------------------------------------------------------------------
# Feature dims (from Geom3D allowable_features / get_atom_feature_dims())
# ---------------------------------------------------------------------------
ATOM_FEATURE_DIMS = [120, 6, 13, 13, 11, 7, 7, 3, 3]
NUM_FEATURES = len(ATOM_FEATURE_DIMS)


def _round_up(x, m):
    return ((x + m - 1) // m) * m


# ---------------------------------------------------------------------------
# Pallas kernel
# ---------------------------------------------------------------------------
def atom_encoder_kernel(idx_ref, table_ref, out_ref, *, num_features):
    # idx_ref:   [tile_n, num_features] int32 (already offset into stacked table)
    # table_ref: [R_pad, D_pad] (bf16 or f32)
    # out_ref:   [tile_n, D_pad] float32
    idx = idx_ref[...]                                      # [tn, F] int32
    tn = idx.shape[0]
    r_pad = table_ref.shape[0]

    rows = lax.broadcasted_iota(jnp.int32, (tn, r_pad), 1)  # [tn, R_pad]

    # Multi-hot via boolean OR (feature ranges are disjoint after offsetting),
    # cast once at the end -> ~half the VALU work of sum-of-onehots.
    hit = rows == idx[:, 0:1]
    for i in range(1, num_features):
        hit = hit | (rows == idx[:, i:i + 1])
    multihot = hit.astype(table_ref.dtype)                  # exact 0/1 in bf16

    # Single MXU matmul implements gather + sum over the 9 tables.
    # bf16 x bf16 uses the native MXU path; accumulation is f32.
    out_ref[...] = jnp.dot(
        multihot, table_ref[...], preferred_element_type=jnp.float32
    ).astype(out_ref.dtype)


# ---------------------------------------------------------------------------
# Wrapper
# ---------------------------------------------------------------------------
def atom_encoder_forward(x, stacked_table, offsets, emb_dim, *, tile_n=256):
    """x: [N, 9] int, stacked_table: [R_pad, D_pad], offsets: [9] int32.

    Returns [N, emb_dim] float32. tile_n should be a multiple of 256
    (v6e/v7x MXU) or at least 128 (v5e); keep N_pad // tile_n >= 2 so both
    v7x TensorCores get work.
    """
    n, f = x.shape
    r_pad, d_pad = stacked_table.shape
    assert f == NUM_FEATURES
    assert d_pad % 128 == 0 and r_pad % 128 == 0
    assert tile_n % 8 == 0

    n_pad = _round_up(max(n, tile_n), tile_n)

    # Offset feature indices into the stacked table (plain-JAX glue).
    # NOTE: out-of-range / negative raw features would simply contribute a
    # zero row here (vs. an index error in the PyTorch reference); inputs are
    # assumed validated upstream.
    idx = x.astype(jnp.int32) + offsets[None, :].astype(jnp.int32)
    if n_pad != n:
        idx = jnp.pad(idx, ((0, n_pad - n), (0, 0)))        # padded rows: valid idx 0

    kernel = functools.partial(atom_encoder_kernel, num_features=f)

    cost = pl.CostEstimate(
        flops=2 * n_pad * r_pad * d_pad,
        transcendentals=0,
        bytes_accessed=(n_pad * f * 4
                        + r_pad * d_pad * stacked_table.dtype.itemsize
                        + n_pad * d_pad * 4),
    )

    out = pl.pallas_call(
        kernel,
        out_shape=jax.ShapeDtypeStruct((n_pad, d_pad), jnp.float32),
        grid_spec=pltpu.PrefetchScalarGridSpec(
            num_scalar_prefetch=0,
            grid=(n_pad // tile_n,),
            in_specs=[
                pl.BlockSpec((tile_n, f), lambda i: (i, 0)),   # index tile
                pl.BlockSpec((r_pad, d_pad), lambda i: (0, 0)),  # full (resident) table
            ],
            out_specs=pl.BlockSpec((tile_n, d_pad), lambda i: (i, 0)),
        ),
        compiler_params=pltpu.CompilerParams(
            dimension_semantics=("parallel",),
        ),
        cost_estimate=cost,
    )(idx, stacked_table)

    # Slice off row padding (tile_n) and lane padding (128-multiple emb_dim).
    return out[:n, :emb_dim]


# ---------------------------------------------------------------------------
# Parameter construction (deterministic xavier-uniform-style init)
# ---------------------------------------------------------------------------
def make_params(emb_dim, key, *, table_dtype=jnp.bfloat16):
    """Returns (per-feature f32 tables, stacked padded table, row offsets).

    The stacked table is row-padded to a multiple of 128 and column-padded to
    a multiple of 128 (lane-dense output), then cast to `table_dtype`
    (bf16 by default -> native MXU path; pass jnp.float32 for bit-exactness).
    """
    tables = []
    for dim in ATOM_FEATURE_DIMS:
        key, sub = jax.random.split(key)
        a = math.sqrt(6.0 / (dim + emb_dim))  # xavier_uniform bound
        tables.append(jax.random.uniform(sub, (dim, emb_dim), jnp.float32, -a, a))

    total_rows = sum(ATOM_FEATURE_DIMS)
    r_pad = _round_up(total_rows, 128)
    d_pad = _round_up(emb_dim, 128)

    stacked = jnp.concatenate(tables, axis=0)
    # Padded rows/cols stay exactly zero -> stray hits contribute nothing.
    stacked = jnp.pad(stacked, ((0, r_pad - total_rows), (0, d_pad - emb_dim)))
    stacked = stacked.astype(table_dtype)

    offs = [0]
    for d in ATOM_FEATURE_DIMS[:-1]:
        offs.append(offs[-1] + d)
    offsets = jnp.asarray(offs, dtype=jnp.int32)
    return tables, stacked, offsets


def reference_forward(x, tables):
    out = 0
    for i in range(x.shape[1]):
        out = out + tables[i][x[:, i]]
    return out


# ---------------------------------------------------------------------------
if __name__ == "__main__":
    emb_dim = 32          # small demo width (padded to 128 lanes internally)
    n_atoms = 500         # not a tile multiple; wrapper pads; 2 grid steps @ tile_n=256

    key = jax.random.PRNGKey(0)
    tables, stacked_table, offsets = make_params(emb_dim, key)

    # Deterministic small integer atom-feature matrix [N, 9].
    cols = []
    for dim in ATOM_FEATURE_DIMS:
        key, sub = jax.random.split(key)
        cols.append(jax.random.randint(sub, (n_atoms, 1), 0, dim, jnp.int32))
    x = jnp.concatenate(cols, axis=1)

    out = atom_encoder_forward(x, stacked_table, offsets, emb_dim, tile_n=256)
    out = jax.block_until_ready(out)

    ref = reference_forward(x, tables)
    assert out.shape == (n_atoms, emb_dim)
    # Table is stored in bf16 (review-recommended native MXU path); the only
    # error vs. the f32 reference is bf16 rounding of table entries (<~1e-2).
    assert jnp.allclose(out, ref, atol=2e-2, rtol=2e-2), "mismatch vs reference"

    print("KERNEL_OK")
</pallas_src>

<mosaic_0001>
module attributes {stable_mosaic.version = 11 : i64} {
  func.func @atom_encoder_kernel(%arg0: i32, %arg1: memref<256x9xi32, #tpu.memory_space<vmem>>, %arg2: memref<256x128xbf16, #tpu.memory_space<vmem>>, %arg3: memref<256x128xf32, #tpu.memory_space<vmem>>) attributes {dimension_semantics = [#tpu.dimension_semantics<parallel>], iteration_bounds = array<i64: 2>, scalar_prefetch = 0 : i64, scratch_operands = 0 : i64, tpu.core_type = #tpu.core_type<tc>, window_params = [{transform_indices = @transform_0, window_bounds = array<i64: 256, 9>}, {pipeline_mode = #tpu.pipeline_mode<synchronous>, transform_indices = @transform_1, window_bounds = array<i64: 256, 128>}, {transform_indices = @transform_2, window_bounds = array<i64: 256, 128>}]} {
    %c0 = arith.constant 0 : index
    %c0_0 = arith.constant 0 : index
    %0 = vector.load %arg1[%c0, %c0_0] : memref<256x9xi32, #tpu.memory_space<vmem>>, vector<256x9xi32>
    %1 = tpu.iota {dimensions = array<i32: 1>} : vector<256x256xi32>
    %2 = vector.extract_strided_slice %0 {offsets = [0, 0], sizes = [256, 1], strides = [1, 1]} : vector<256x9xi32> to vector<256x1xi32>
    %3 = vector.broadcast %2 : vector<256x1xi32> to vector<256x256xi32>
    %4 = arith.cmpi eq, %1, %3 : vector<256x256xi32>
    %5 = vector.extract_strided_slice %0 {offsets = [0, 1], sizes = [256, 1], strides = [1, 1]} : vector<256x9xi32> to vector<256x1xi32>
    %6 = vector.broadcast %5 : vector<256x1xi32> to vector<256x256xi32>
    %7 = arith.cmpi eq, %1, %6 : vector<256x256xi32>
    %8 = arith.ori %4, %7 : vector<256x256xi1>
    %9 = vector.extract_strided_slice %0 {offsets = [0, 2], sizes = [256, 1], strides = [1, 1]} : vector<256x9xi32> to vector<256x1xi32>
    %10 = vector.broadcast %9 : vector<256x1xi32> to vector<256x256xi32>
    %11 = arith.cmpi eq, %1, %10 : vector<256x256xi32>
    %12 = arith.ori %8, %11 : vector<256x256xi1>
    %13 = vector.extract_strided_slice %0 {offsets = [0, 3], sizes = [256, 1], strides = [1, 1]} : vector<256x9xi32> to vector<256x1xi32>
    %14 = vector.broadcast %13 : vector<256x1xi32> to vector<256x256xi32>
    %15 = arith.cmpi eq, %1, %14 : vector<256x256xi32>
    %16 = arith.ori %12, %15 : vector<256x256xi1>
    %17 = vector.extract_strided_slice %0 {offsets = [0, 4], sizes = [256, 1], strides = [1, 1]} : vector<256x9xi32> to vector<256x1xi32>
    %18 = vector.broadcast %17 : vector<256x1xi32> to vector<256x256xi32>
    %19 = arith.cmpi eq, %1, %18 : vector<256x256xi32>
    %20 = arith.ori %16, %19 : vector<256x256xi1>
    %21 = vector.extract_strided_slice %0 {offsets = [0, 5], sizes = [256, 1], strides = [1, 1]} : vector<256x9xi32> to vector<256x1xi32>
    %22 = vector.broadcast %21 : vector<256x1xi32> to vector<256x256xi32>
    %23 = arith.cmpi eq, %1, %22 : vector<256x256xi32>
    %24 = arith.ori %20, %23 : vector<256x256xi1>
    %25 = vector.extract_strided_slice %0 {offsets = [0, 6], sizes = [256, 1], strides = [1, 1]} : vector<256x9xi32> to vector<256x1xi32>
    %26 = vector.broadcast %25 : vector<256x1xi32> to vector<256x256xi32>
    %27 = arith.cmpi eq, %1, %26 : vector<256x256xi32>
    %28 = arith.ori %24, %27 : vector<256x256xi1>
    %29 = vector.extract_strided_slice %0 {offsets = [0, 7], sizes = [256, 1], strides = [1, 1]} : vector<256x9xi32> to vector<256x1xi32>
    %30 = vector.broadcast %29 : vector<256x1xi32> to vector<256x256xi32>
    %31 = arith.cmpi eq, %1, %30 : vector<256x256xi32>
    %32 = arith.ori %28, %31 : vector<256x256xi1>
    %33 = vector.extract_strided_slice %0 {offsets = [0, 8], sizes = [256, 1], strides = [1, 1]} : vector<256x9xi32> to vector<256x1xi32>
    %34 = vector.broadcast %33 : vector<256x1xi32> to vector<256x256xi32>
    %35 = arith.cmpi eq, %1, %34 : vector<256x256xi32>
    %36 = arith.ori %32, %35 : vector<256x256xi1>
    %37 = arith.extui %36 : vector<256x256xi1> to vector<256x256xi32>
    %38 = arith.sitofp %37 : vector<256x256xi32> to vector<256x256xf32>
    %39 = arith.truncf %38 : vector<256x256xf32> to vector<256x256xbf16>
    %c0_1 = arith.constant 0 : index
    %c0_2 = arith.constant 0 : index
    %40 = vector.load %arg2[%c0_1, %c0_2] : memref<256x128xbf16, #tpu.memory_space<vmem>>, vector<256x128xbf16>
    %cst = arith.constant dense<0.000000e+00> : vector<256x128xf32>
    %41 = tpu.matmul %39, %40, %cst {dimension_numbers = #tpu.dot_dimension_numbers<[1], [0], [0], [1], [0, 0, 1, 1], [], []>} : vector<256x256xbf16>, vector<256x128xbf16>, vector<256x128xf32> -> vector<256x128xf32>
    %c0_3 = arith.constant 0 : index
    %c0_4 = arith.constant 0 : index
    %42 = vector.load %arg3[%c0_3, %c0_4] : memref<256x128xf32, #tpu.memory_space<vmem>>, vector<256x128xf32>
    tpu.vector_store %arg3[%c0_3, %c0_4], %41 {strides = array<i32>} : memref<256x128xf32, #tpu.memory_space<vmem>>, vector<256x128xf32>,
    return
  }
  func.func @transform_0(%arg0: i32) -> (i32, i32) {
    %c0_i32 = arith.constant 0 : i32
    %c0_i32_0 = arith.constant 0 : i32
    return %arg0, %c0_i32 : i32, i32
  }
  func.func @transform_1(%arg0: i32) -> (i32, i32) {
    %c0_i32 = arith.constant 0 : i32
    %c0_i32_0 = arith.constant 0 : i32
    %c0_i32_1 = arith.constant 0 : i32
    return %c0_i32, %c0_i32_0 : i32, i32
  }
  func.func @transform_2(%arg0: i32) -> (i32, i32) {
    %c0_i32 = arith.constant 0 : i32
    %c0_i32_0 = arith.constant 0 : i32
    return %arg0, %c0_i32 : i32, i32
  }
}

</mosaic_0001>

<llo_original>
// kernel: tpu_custom_call.1
$region0: #{tpu_custom_call.1}
  #allocation0 [shape = 'u32[]', space=smem, size = 0x4, offset = 0x4, fixed_abs, tag = 'smem constant byte address 0x4 - core index']
  #allocation1 [shape = 'u32[144,128]{1,0:T(1,128)}', space=vmem, size = 0x12000, scoped, tag = 'internal scratch']
  %s0 = inlined_call_operand.vmem [shape: s32[512,9], index: 0, kind: input, shape index: {}]
  %s1 = inlined_call_operand.vmem [shape: bf16[256,128], index: 1, kind: input, shape index: {}]
  %s2 = inlined_call_operand.hbm [shape: f32[512,128], index: 2, kind: output, shape index: {}]
  %s3 = sld [smem:[#allocation0]]
  $region41: #{tpu_custom_call.1} parent=0
    _
  %s5 = ssub.s32 1, %s3
  %s6 = scalar_select 0, %s5, %s3
  $region1: #{tpu_custom_call.1} parent=0
    #allocation2 [shape = 'u8[262144]{0}', space=vmem, size = 0x40000, scoped, tag = 'output window, operand 0']
    #allocation3 [shape = 's32[2]{0}', space=sflag, size = 0x8, scoped, tag = 'scoped memory for tpu_custom_call.1']
    %7 = vsyncpa [#allocation3], 0
    %s8 = scalar_lea.sflag [#allocation3], 1
    %9 = vsyncpa %s8, 0
    loop: start=0, step=1, limit=4
    $region2: #{tpu_custom_call.1} parent=1 // loop_pre_header
      _
    $region3: #{tpu_custom_call.1} parent=1 // loop_header
      %s11 = sphi 0, %s15
      %p12 = scmp.ge.s32.totalorder %s11, 4
      %s21 = sphi 0, %s23
      %s24 = sphi 0, %s21
      %s25 = sphi 0, %s24
      %s41 = sphi 0, %s25
      %s45 = sphi 0, %s45
      %s47 = sphi 0, %s45
      %s48 = sphi 0, %s47
      %s62 = sphi 0, %s48
      %s68 = sphi 0, %s70
      %s71 = sphi 0, %s68
      %s72 = sphi 0, %s71
      %s88 = sphi 0, %s72
    $region4: #{tpu_custom_call.1} parent=1 // loop_header_branch
      %14 = sbr.rel (%p12) target = $region8
    $region5: #{tpu_custom_call.1} parent=1 // loop_body
      %s16 = ssub.s32 %s11, 1
      %s17 = ssub.s32 %s11, 2
      %s18 = sadd.s32 %s11, 1
      %s19 = ssub.s32 %s11, %s18
      %p20 = scmp.eq.s32.totalorder %s19, 0
      %s22 = sadd.s32 %s21, 1
      %s23 = scalar_select %p20, %s21, %s22
      %p26 = pneg %p20
      %p27 = scmp.eq.s32.totalorder %s11, 1
      %p28 = por %p26, %p27
      %p29 = scmp.ne.s32.totalorder %s21, %s24
      %p30 = scmp.eq.s32.totalorder %s11, 0
      %p31 = por %p29, %p30
      %p32 = scmp.ne.s32.totalorder %s21, %s24
      %p33 = scmp.eq.s32.totalorder %s16, 1
      %p34 = por %p32, %p33
      %p35 = scmp.ne.s32.totalorder %s24, %s25
      %p36 = scmp.eq.s32.totalorder %s16, 0
      %p37 = por %p35, %p36
      %p38 = scmp.ne.s32.totalorder %s24, %s25
      %p39 = scmp.eq.s32.totalorder %s17, 1
      %p40 = por %p38, %p39
      %p42 = scmp.ne.s32.totalorder %s25, %s41
      %p43 = scmp.eq.s32.totalorder %s17, 0
      %p44 = por %p42, %p43
      %s46 = sadd.s32 %s45, 1
      %p49 = scmp.eq.s32.totalorder %s11, 1
      %p50 = scmp.ne.s32.totalorder %s45, %s47
      %p51 = scmp.eq.s32.totalorder %s11, 0
      %p52 = por %p50, %p51
      %p53 = scmp.ne.s32.totalorder %s45, %s47
      %p54 = scmp.eq.s32.totalorder %s16, 1
      %p55 = por %p53, %p54
      %p56 = scmp.ne.s32.totalorder %s47, %s48
      %p57 = scmp.eq.s32.totalorder %s16, 0
      %p58 = por %p56, %p57
      %p59 = scmp.ne.s32.totalorder %s47, %s48
      %p60 = scmp.eq.s32.totalorder %s17, 1
      %p61 = por %p59, %p60
      %p63 = scmp.ne.s32.totalorder %s48, %s62
      %p64 = scmp.eq.s32.totalorder %s17, 0
      %p65 = por %p63, %p64
      %s66 = ssub.s32 %s11, %s18
      %p67 = scmp.eq.s32.totalorder %s66, 0
      %s69 = sadd.s32 %s68, 1
      %s70 = scalar_select %p67, %s68, %s69
      %p73 = pneg %p67
      %p74 = scmp.eq.s32.totalorder %s11, 1
      %p75 = por %p73, %p74
      %p76 = scmp.ne.s32.totalorder %s68, %s71
      %p77 = scmp.eq.s32.totalorder %s11, 0
      %p78 = por %p76, %p77
      %p79 = scmp.ne.s32.totalorder %s68, %s71
      %p80 = scmp.eq.s32.totalorder %s16, 1
      %p81 = por %p79, %p80
      %p82 = scmp.ne.s32.totalorder %s71, %s72
      %p83 = scmp.eq.s32.totalorder %s16, 0
      %p84 = por %p82, %p83
      %p85 = scmp.ne.s32.totalorder %s71, %s72
      %p86 = scmp.eq.s32.totalorder %s17, 1
      %p87 = por %p85, %p86
      %p89 = scmp.ne.s32.totalorder %s72, %s88
      %p90 = scmp.eq.s32.totalorder %s17, 0
      %p91 = por %p89, %p90
      %p92 = scmp.le.s32.totalorder 1, %s11
      %p93 = scmp.lt.s32.totalorder %s11, 3
      %p94 = pnand %p92, %p93
      %p95 = pneg %p94
      // Predicated region
      $region9: #{tpu_custom_call.1} parent=5 // pred_check
        _
      $region10: #{tpu_custom_call.1} parent=5 // pred_check_branch
        %97 = sbr.rel (%p94) target = $region12
      $region11: #{tpu_custom_call.1} parent=5 // pred_region
        %s98 = ssub.s32 %s11, 1
        // Predicated region
        $region13: #{tpu_custom_call.1} parent=11 // pred_check
          %p99 = pneg %p58
        $region14: #{tpu_custom_call.1} parent=11 // pred_check_branch
          %101 = sbr.rel (%p99) target = $region16
        $region15: #{tpu_custom_call.1} parent=11 // pred_region
          _
        $region16: #{tpu_custom_call.1} parent=11 // pred_fallthru
          _
      $region12: #{tpu_custom_call.1} parent=5 // pred_fallthru
        _
      %p102 = scmp.lt.s32.totalorder %s11, 2
      // Predicated region
      $region17: #{tpu_custom_call.1} parent=5 // pred_check
        %p103 = pneg %p102
      $region18: #{tpu_custom_call.1} parent=5 // pred_check_branch
        %105 = sbr.rel (%p103) target = $region20
      $region19: #{tpu_custom_call.1} parent=5 // pred_region
        // Predicated region
        $region21: #{tpu_custom_call.1} parent=19 // pred_check
          %p106 = pneg %p31
        $region22: #{tpu_custom_call.1} parent=19 // pred_check_branch
          %108 = sbr.rel (%p106) target = $region24
        $region23: #{tpu_custom_call.1} parent=19 // pred_region
          %s109 = smul.u32 32, %s11
          %p110 = scmp.lt.s32.totalorder %s109, 63
          %s111 = scalar_select %p110, %s109, 63
          %s112 = smul.addr %s111, 8
          %s113 = scalar_lea.vmem %s0, %s112
          %s114 = smul.u32 32, %s11
        $region24: #{tpu_custom_call.1} parent=19 // pred_fallthru
          _
      $region20: #{tpu_custom_call.1} parent=5 // pred_fallthru
        _
      %p115 = scmp.le.s32.totalorder 1, %s11
      %p116 = scmp.lt.s32.totalorder %s11, 3
      %p117 = pnand %p115, %p116
      %p118 = pneg %p117
      // Predicated region
      $region25: #{tpu_custom_call.1} parent=5 // pred_check
        _
      $region26: #{tpu_custom_call.1} parent=5 // pred_check_branch
        %120 = sbr.rel (%p117) target = $region28
      $region27: #{tpu_custom_call.1} parent=5 // pred_region
        %s121 = ssub.s32 %s11, 1
        %s122 = smul.u32 32, %s16
        %p123 = scmp.lt.s32.totalorder %s122, 63
        %s124 = scalar_select %p123, %s122, 63
        %s125 = smul.addr %s124, 8
        %s126 = scalar_lea.vmem %s0, %s125
        %p127 = pneg %p37
        %p128 = pneg %p34
        %p129 = pneg %p58
        %p130 = pneg %p55
        %p131 = pneg %p84
        %p132 = pneg %p81
        %s133 = sand.u32 %s71, 1
        %s134 = scalar_lea.sflag [#allocation3], %s133
        %s135 = sand.u32 %s71, 1
        %s136 = smul.addr %s135, 256
        %s137 = scalar_lea.vmem [#allocation2], %s136
        %s138 = smul.u32 32, %s16
        %p139 = scmp.lt.s32.totalorder %s138, 63
        %s140 = scalar_select %p139, %s138, 63
        %s141 = smul.addr %s140, 8
        %s142 = scalar_lea.vmem %s0, %s141
        %s143 = smul.u32 32, %s16
        %s144 = smul.u32 32, %s16
        %v146 = vld [vmem:[%s142] sm:$0xff]
        %v147 = vld [vmem:[%s142 + $0x8] sm:$0xff]
        %v148 = vld [vmem:[%s142 + $0x10] sm:$0xff]
        %v149 = vld [vmem:[%s142 + $0x18] sm:$0xff]
        %v150 = vld [vmem:[%s142 + $0x20] sm:$0xff]
        %v151 = vld [vmem:[%s142 + $0x28] sm:$0xff]
        %v152 = vld [vmem:[%s142 + $0x30] sm:$0xff]
        %v153 = vld [vmem:[%s142 + $0x38] sm:$0xff]
        %v154 = vld [vmem:[%s142 + $0x40] sm:$0xff]
        %v155 = vld [vmem:[%s142 + $0x48] sm:$0xff]
        %v156 = vld [vmem:[%s142 + $0x50] sm:$0xff]
        %v157 = vld [vmem:[%s142 + $0x58] sm:$0xff]
        %v158 = vld [vmem:[%s142 + $0x60] sm:$0xff]
        %v159 = vld [vmem:[%s142 + $0x68] sm:$0xff]
        %v160 = vld [vmem:[%s142 + $0x70] sm:$0xff]
        %v161 = vld [vmem:[%s142 + $0x78] sm:$0xff]
        %v162 = vld [vmem:[%s142 + $0x80] sm:$0xff]
        %v163 = vld [vmem:[%s142 + $0x88] sm:$0xff]
        %v164 = vld [vmem:[%s142 + $0x90] sm:$0xff]
        %v165 = vld [vmem:[%s142 + $0x98] sm:$0xff]
        %v166 = vld [vmem:[%s142 + $0xa0] sm:$0xff]
        %v167 = vld [vmem:[%s142 + $0xa8] sm:$0xff]
        %v168 = vld [vmem:[%s142 + $0xb0] sm:$0xff]
        %v169 = vld [vmem:[%s142 + $0xb8] sm:$0xff]
        %v170 = vld [vmem:[%s142 + $0xc0] sm:$0xff]
        %v171 = vld [vmem:[%s142 + $0xc8] sm:$0xff]
        %v172 = vld [vmem:[%s142 + $0xd0] sm:$0xff]
        %v173 = vld [vmem:[%s142 + $0xd8] sm:$0xff]
        %v174 = vld [vmem:[%s142 + $0xe0] sm:$0xff]
        %v175 = vld [vmem:[%s142 + $0xe8] sm:$0xff]
        %v176 = vld [vmem:[%s142 + $0xf0] sm:$0xff]
        %v177 = vld [vmem:[%s142 + $0xf8] sm:$0xff]
        %v178 = vlaneseq
        %v179 = vand.u32 %v178, 127
        %v180 = vadd.s32 %v179, 128
        %181 = vset.pattern.permute.xlu0 0
        %182 = vperm.xlu0 %181, %v146
        %v183 = vpop.permute.xlu0 %182
        %184 = vset.pattern.permute.xlu0 0
        %185 = vperm.xlu0 %184, %v147
        %v186 = vpop.permute.xlu0 %185
        %187 = vset.pattern.permute.xlu0 0
        %188 = vperm.xlu0 %187, %v148
        %v189 = vpop.permute.xlu0 %188
        %190 = vset.pattern.permute.xlu0 0
        %191 = vperm.xlu0 %190, %v149
        %v192 = vpop.permute.xlu0 %191
        %193 = vset.pattern.permute.xlu0 0
        %194 = vperm.xlu0 %193, %v150
        %v195 = vpop.permute.xlu0 %194
        %196 = vset.pattern.permute.xlu0 0
        %197 = vperm.xlu0 %196, %v151
        %v198 = vpop.permute.xlu0 %197
        %199 = vset.pattern.permute.xlu0 0
        %200 = vperm.xlu0 %199, %v152
        %v201 = vpop.permute.xlu0 %200
        %202 = vset.pattern.permute.xlu0 0
        %203 = vperm.xlu0 %202, %v153
        %v204 = vpop.permute.xlu0 %203
        %205 = vset.pattern.permute.xlu0 0
        %206 = vperm.xlu0 %205, %v154
        %v207 = vpop.permute.xlu0 %206
        %208 = vset.pattern.permute.xlu0 0
        %209 = vperm.xlu0 %208, %v155
        %v210 = vpop.permute.xlu0 %209
        %211 = vset.pattern.permute.xlu0 0
        %212 = vperm.xlu0 %211, %v156
        %v213 = vpop.permute.xlu0 %212
        %214 = vset.pattern.permute.xlu0 0
        %215 = vperm.xlu0 %214, %v157
        %v216 = vpop.permute.xlu0 %215
        %217 = vset.pattern.permute.xlu0 0
        %218 = vperm.xlu0 %217, %v158
        %v219 = vpop.permute.xlu0 %218
        %220 = vset.pattern.permute.xlu0 0
        %221 = vperm.xlu0 %220, %v159
        %v222 = vpop.permute.xlu0 %221
        %223 = vset.pattern.permute.xlu0 0
        %224 = vperm.xlu0 %223, %v160
        %v225 = vpop.permute.xlu0 %224
        %226 = vset.pattern.permute.xlu0 0
        %227 = vperm.xlu0 %226, %v161
        %v228 = vpop.permute.xlu0 %227
        %229 = vset.pattern.permute.xlu0 0
        %230 = vperm.xlu0 %229, %v162
        %v231 = vpop.permute.xlu0 %230
        %232 = vset.pattern.permute.xlu0 0
        %233 = vperm.xlu0 %232, %v163
        %v234 = vpop.permute.xlu0 %233
        %235 = vset.pattern.permute.xlu0 0
        %236 = vperm.xlu0 %235, %v164
        %v237 = vpop.permute.xlu0 %236
        %238 = vset.pattern.permute.xlu0 0
        %239 = vperm.xlu0 %238, %v165
        %v240 = vpop.permute.xlu0 %239
        %241 = vset.pattern.permute.xlu0 0
        %242 = vperm.xlu0 %241, %v166
        %v243 = vpop.permute.xlu0 %242
        %244 = vset.pattern.permute.xlu0 0
        %245 = vperm.xlu0 %244, %v167
        %v246 = vpop.permute.xlu0 %245
        %247 = vset.pattern.permute.xlu0 0
        %248 = vperm.xlu0 %247, %v168
        %v249 = vpop.permute.xlu0 %248
        %250 = vset.pattern.permute.xlu0 0
        %251 = vperm.xlu0 %250, %v169
        %v252 = vpop.permute.xlu0 %251
        %253 = vset.pattern.permute.xlu0 0
        %254 = vperm.xlu0 %253, %v170
        %v255 = vpop.permute.xlu0 %254
        %256 = vset.pattern.permute.xlu0 0
        %257 = vperm.xlu0 %256, %v171
        %v258 = vpop.permute.xlu0 %257
        %259 = vset.pattern.permute.xlu0 0
        %260 = vperm.xlu0 %259, %v172
        %v261 = vpop.permute.xlu0 %260
        %262 = vset.pattern.permute.xlu0 0
        %263 = vperm.xlu0 %262, %v173
        %v264 = vpop.permute.xlu0 %263
        %265 = vset.pattern.permute.xlu0 0
        %266 = vperm.xlu0 %265, %v174
        %v267 = vpop.permute.xlu0 %266
        %268 = vset.pattern.permute.xlu0 0
        %269 = vperm.xlu0 %268, %v175
        %v270 = vpop.permute.xlu0 %269
        %271 = vset.pattern.permute.xlu0 0
        %272 = vperm.xlu0 %271, %v176
        %v273 = vpop.permute.xlu0 %272
        %274 = vset.pattern.permute.xlu0 0
        %275 = vperm.xlu0 %274, %v177
        %v276 = vpop.permute.xlu0 %275
        %vm277 = vcmp.eq.s32.totalorder %v179, %v183
        %vm278 = vcmp.eq.s32.totalorder %v180, %v183
        %vm279 = vcmp.eq.s32.totalorder %v179, %v186
        %vm280 = vcmp.eq.s32.totalorder %v180, %v186
        %vm281 = vcmp.eq.s32.totalorder %v179, %v189
        %vm282 = vcmp.eq.s32.totalorder %v180, %v189
        %vm283 = vcmp.eq.s32.totalorder %v179, %v192
        %vm284 = vcmp.eq.s32.totalorder %v180, %v192
        %vm285 = vcmp.eq.s32.totalorder %v179, %v195
        %vm286 = vcmp.eq.s32.totalorder %v180, %v195
        %vm287 = vcmp.eq.s32.totalorder %v179, %v198
        %vm288 = vcmp.eq.s32.totalorder %v180, %v198
        %vm289 = vcmp.eq.s32.totalorder %v179, %v201
        %vm290 = vcmp.eq.s32.totalorder %v180, %v201
        %vm291 = vcmp.eq.s32.totalorder %v179, %v204
        %vm292 = vcmp.eq.s32.totalorder %v180, %v204
        %vm293 = vcmp.eq.s32.totalorder %v179, %v207
        %vm294 = vcmp.eq.s32.totalorder %v180, %v207
        %vm295 = vcmp.eq.s32.totalorder %v179, %v210
        %vm296 = vcmp.eq.s32.totalorder %v180, %v210
        %vm297 = vcmp.eq.s32.totalorder %v179, %v213
        %vm298 = vcmp.eq.s32.totalorder %v180, %v213
        %vm299 = vcmp.eq.s32.totalorder %v179, %v216
        %vm300 = vcmp.eq.s32.totalorder %v180, %v216
        %vm301 = vcmp.eq.s32.totalorder %v179, %v219
        %vm302 = vcmp.eq.s32.totalorder %v180, %v219
        %vm303 = vcmp.eq.s32.totalorder %v179, %v222
        %vm304 = vcmp.eq.s32.totalorder %v180, %v222
        %vm305 = vcmp.eq.s32.totalorder %v179, %v225
        %vm306 = vcmp.eq.s32.totalorder %v180, %v225
        %vm307 = vcmp.eq.s32.totalorder %v179, %v228
        %vm308 = vcmp.eq.s32.totalorder %v180, %v228
        %vm309 = vcmp.eq.s32.totalorder %v179, %v231
        %vm310 = vcmp.eq.s32.totalorder %v180, %v231
        %vm311 = vcmp.eq.s32.totalorder %v179, %v234
        %vm312 = vcmp.eq.s32.totalorder %v180, %v234
        %vm313 = vcmp.eq.s32.totalorder %v179, %v237
        %vm314 = vcmp.eq.s32.totalorder %v180, %v237
        %vm315 = vcmp.eq.s32.totalorder %v179, %v240
        %vm316 = vcmp.eq.s32.totalorder %v180, %v240
        %vm317 = vcmp.eq.s32.totalorder %v179, %v243
        %vm318 = vcmp.eq.s32.totalorder %v180, %v243
        %vm319 = vcmp.eq.s32.totalorder %v179, %v246
        %vm320 = vcmp.eq.s32.totalorder %v180, %v246
        %vm321 = vcmp.eq.s32.totalorder %v179, %v249
        %vm322 = vcmp.eq.s32.totalorder %v180, %v249
        %vm323 = vcmp.eq.s32.totalorder %v179, %v252
        %vm324 = vcmp.eq.s32.totalorder %v180, %v252
        %vm325 = vcmp.eq.s32.totalorder %v179, %v255
        %vm326 = vcmp.eq.s32.totalorder %v180, %v255
        %vm327 = vcmp.eq.s32.totalorder %v179, %v258
        %vm328 = vcmp.eq.s32.totalorder %v180, %v258
        %vm329 = vcmp.eq.s32.totalorder %v179, %v261
        %vm330 = vcmp.eq.s32.totalorder %v180, %v261
        %vm331 = vcmp.eq.s32.totalorder %v179, %v264
        %vm332 = vcmp.eq.s32.totalorder %v180, %v264
        %vm333 = vcmp.eq.s32.totalorder %v179, %v267
        %vm334 = vcmp.eq.s32.totalorder %v180, %v267
        %vm335 = vcmp.eq.s32.totalorder %v179, %v270
        %vm336 = vcmp.eq.s32.totalorder %v180, %v270
        %vm337 = vcmp.eq.s32.totalorder %v179, %v273
        %vm338 = vcmp.eq.s32.totalorder %v180, %v273
        %vm339 = vcmp.eq.s32.totalorder %v179, %v276
        %vm340 = vcmp.eq.s32.totalorder %v180, %v276
        %341 = vset.pattern.permute.xlu0 1
        %342 = vperm.xlu0 %341, %v146
        %v343 = vpop.permute.xlu0 %342
        %344 = vset.pattern.permute.xlu0 1
        %345 = vperm.xlu0 %344, %v147
        %v346 = vpop.permute.xlu0 %345
        %347 = vset.pattern.permute.xlu0 1
        %348 = vperm.xlu0 %347, %v148
        %v349 = vpop.permute.xlu0 %348
        %350 = vset.pattern.permute.xlu0 1
        %351 = vperm.xlu0 %350, %v149
        %v352 = vpop.permute.xlu0 %351
        %353 = vset.pattern.permute.xlu0 1
        %354 = vperm.xlu0 %353, %v150
        %v355 = vpop.permute.xlu0 %354
        %356 = vset.pattern.permute.xlu0 1
        %357 = vperm.xlu0 %356, %v151
        %v358 = vpop.permute.xlu0 %357
        %359 = vset.pattern.permute.xlu0 1
        %360 = vperm.xlu0 %359, %v152
        %v361 = vpop.permute.xlu0 %360
        %362 = vset.pattern.permute.xlu0 1
        %363 = vperm.xlu0 %362, %v153
        %v364 = vpop.permute.xlu0 %363
        %365 = vset.pattern.permute.xlu0 1
        %366 = vperm.xlu0 %365, %v154
        %v367 = vpop.permute.xlu0 %366
        %368 = vset.pattern.permute.xlu0 1
        %369 = vperm.xlu0 %368, %v155
        %v370 = vpop.permute.xlu0 %369
        %371 = vset.pattern.permute.xlu0 1
        %372 = vperm.xlu0 %371, %v156
        %v373 = vpop.permute.xlu0 %372
        %374 = vset.pattern.permute.xlu0 1
        %375 = vperm.xlu0 %374, %v157
        %v376 = vpop.permute.xlu0 %375
        %377 = vset.pattern.permute.xlu0 1
        %378 = vperm.xlu0 %377, %v158
        %v379 = vpop.permute.xlu0 %378
        %380 = vset.pattern.permute.xlu0 1
        %381 = vperm.xlu0 %380, %v159
        %v382 = vpop.permute.xlu0 %381
        %383 = vset.pattern.permute.xlu0 1
        %384 = vperm.xlu0 %383, %v160
        %v385 = vpop.permute.xlu0 %384
        %386 = vset.pattern.permute.xlu0 1
        %387 = vperm.xlu0 %386, %v161
        %v388 = vpop.permute.xlu0 %387
        %389 = vset.pattern.permute.xlu0 1
        %390 = vperm.xlu0 %389, %v162
        %v391 = vpop.permute.xlu0 %390
        %392 = vset.pattern.permute.xlu0 1
        %393 = vperm.xlu0 %392, %v163
        %v394 = vpop.permute.xlu0 %393
        %395 = vset.pattern.permute.xlu0 1
        %396 = vperm.xlu0 %395, %v164
        %v397 = vpop.permute.xlu0 %396
        %398 = vset.pattern.permute.xlu0 1
        %399 = vperm.xlu0 %398, %v165
        %v400 = vpop.permute.xlu0 %399
        %401 = vset.pattern.permute.xlu0 1
        %402 = vperm.xlu0 %401, %v166
        %v403 = vpop.permute.xlu0 %402
        %404 = vset.pattern.permute.xlu0 1
        %405 = vperm.xlu0 %404, %v167
        %v406 = vpop.permute.xlu0 %405
        %407 = vset.pattern.permute.xlu0 1
        %408 = vperm.xlu0 %407, %v168
        %v409 = vpop.permute.xlu0 %408
        %410 = vset.pattern.permute.xlu0 1
        %411 = vperm.xlu0 %410, %v169
        %v412 = vpop.permute.xlu0 %411
        %413 = vset.pattern.permute.xlu0 1
        %414 = vperm.xlu0 %413, %v170
        %v415 = vpop.permute.xlu0 %414
        %416 = vset.pattern.permute.xlu0 1
        %417 = vperm.xlu0 %416, %v171
        %v418 = vpop.permute.xlu0 %417
        %419 = vset.pattern.permute.xlu0 1
        %420 = vperm.xlu0 %419, %v172
        %v421 = vpop.permute.xlu0 %420
        %422 = vset.pattern.permute.xlu0 1
        %423 = vperm.xlu0 %422, %v173
        %v424 = vpop.permute.xlu0 %423
        %425 = vset.pattern.permute.xlu0 1
        %426 = vperm.xlu0 %425, %v174
        %v427 = vpop.permute.xlu0 %426
        %428 = vset.pattern.permute.xlu0 1
        %429 = vperm.xlu0 %428, %v175
        %v430 = vpop.permute.xlu0 %429
        %431 = vset.pattern.permute.xlu0 1
        %432 = vperm.xlu0 %431, %v176
        %v433 = vpop.permute.xlu0 %432
        %434 = vset.pattern.permute.xlu0 1
        %435 = vperm.xlu0 %434, %v177
        %v436 = vpop.permute.xlu0 %435
        %vm437 = vcmp.eq.s32.totalorder %v179, %v343
        %vm438 = vcmp.eq.s32.totalorder %v180, %v343
        %vm439 = vcmp.eq.s32.totalorder %v179, %v346
        %vm440 = vcmp.eq.s32.totalorder %v180, %v346
        %vm441 = vcmp.eq.s32.totalorder %v179, %v349
        %vm442 = vcmp.eq.s32.totalorder %v180, %v349
        %vm443 = vcmp.eq.s32.totalorder %v179, %v352
        %vm444 = vcmp.eq.s32.totalorder %v180, %v352
        %vm445 = vcmp.eq.s32.totalorder %v179, %v355
        %vm446 = vcmp.eq.s32.totalorder %v180, %v355
        %vm447 = vcmp.eq.s32.totalorder %v179, %v358
        %vm448 = vcmp.eq.s32.totalorder %v180, %v358
        %vm449 = vcmp.eq.s32.totalorder %v179, %v361
        %vm450 = vcmp.eq.s32.totalorder %v180, %v361
        %vm451 = vcmp.eq.s32.totalorder %v179, %v364
        %vm452 = vcmp.eq.s32.totalorder %v180, %v364
        %vm453 = vcmp.eq.s32.totalorder %v179, %v367
        %vm454 = vcmp.eq.s32.totalorder %v180, %v367
        %vm455 = vcmp.eq.s32.totalorder %v179, %v370
        %vm456 = vcmp.eq.s32.totalorder %v180, %v370
        %vm457 = vcmp.eq.s32.totalorder %v179, %v373
        %vm458 = vcmp.eq.s32.totalorder %v180, %v373
        %vm459 = vcmp.eq.s32.totalorder %v179, %v376
        %vm460 = vcmp.eq.s32.totalorder %v180, %v376
        %vm461 = vcmp.eq.s32.totalorder %v179, %v379
        %vm462 = vcmp.eq.s32.totalorder %v180, %v379
        %vm463 = vcmp.eq.s32.totalorder %v179, %v382
        %vm464 = vcmp.eq.s32.totalorder %v180, %v382
        %vm465 = vcmp.eq.s32.totalorder %v179, %v385
        %vm466 = vcmp.eq.s32.totalorder %v180, %v385
        %vm467 = vcmp.eq.s32.totalorder %v179, %v388
        %vm468 = vcmp.eq.s32.totalorder %v180, %v388
        %vm469 = vcmp.eq.s32.totalorder %v179, %v391
        %vm470 = vcmp.eq.s32.totalorder %v180, %v391
        %vm471 = vcmp.eq.s32.totalorder %v179, %v394
        %vm472 = vcmp.eq.s32.totalorder %v180, %v394
        %vm473 = vcmp.eq.s32.totalorder %v179, %v397
        %vm474 = vcmp.eq.s32.totalorder %v180, %v397
        %vm475 = vcmp.eq.s32.totalorder %v179, %v400
        %vm476 = vcmp.eq.s32.totalorder %v180, %v400
        %vm477 = vcmp.eq.s32.totalorder %v179, %v403
        %vm478 = vcmp.eq.s32.totalorder %v180, %v403
        %vm479 = vcmp.eq.s32.totalorder %v179, %v406
        %vm480 = vcmp.eq.s32.totalorder %v180, %v406
        %vm481 = vcmp.eq.s32.totalorder %v179, %v409
        %vm482 = vcmp.eq.s32.totalorder %v180, %v409
        %vm483 = vcmp.eq.s32.totalorder %v179, %v412
        %vm484 = vcmp.eq.s32.totalorder %v180, %v412
        %vm485 = vcmp.eq.s32.totalorder %v179, %v415
        %vm486 = vcmp.eq.s32.totalorder %v180, %v415
        %vm487 = vcmp.eq.s32.totalorder %v179, %v418
        %vm488 = vcmp.eq.s32.totalorder %v180, %v418
        %vm489 = vcmp.eq.s32.totalorder %v179, %v421
        %vm490 = vcmp.eq.s32.totalorder %v180, %v421
        %vm491 = vcmp.eq.s32.totalorder %v179, %v424
        %vm492 = vcmp.eq.s32.totalorder %v180, %v424
        %vm493 = vcmp.eq.s32.totalorder %v179, %v427
        %vm494 = vcmp.eq.s32.totalorder %v180, %v427
        %vm495 = vcmp.eq.s32.totalorder %v179, %v430
        %vm496 = vcmp.eq.s32.totalorder %v180, %v430
        %vm497 = vcmp.eq.s32.totalorder %v179, %v433
        %vm498 = vcmp.eq.s32.totalorder %v180, %v433
        %vm499 = vcmp.eq.s32.totalorder %v179, %v436
        %vm500 = vcmp.eq.s32.totalorder %v180, %v436
        %vm501 = vmor %vm277, %vm437
        %vm502 = vmor %vm278, %vm438
        %vm503 = vmor %vm279, %vm439
        %vm504 = vmor %vm280, %vm440
        %vm505 = vmor %vm281, %vm441
        %vm506 = vmor %vm282, %vm442
        %vm507 = vmor %vm283, %vm443
        %vm508 = vmor %vm284, %vm444
        %vm509 = vmor %vm285, %vm445
        %vm510 = vmor %vm286, %vm446
        %vm511 = vmor %vm287, %vm447
        %vm512 = vmor %vm288, %vm448
        %vm513 = vmor %vm289, %vm449
        %vm514 = vmor %vm290, %vm450
        %vm515 = vmor %vm291, %vm451
        %vm516 = vmor %vm292, %vm452
        %vm517 = vmor %vm293, %vm453
        %vm518 = vmor %vm294, %vm454
        %vm519 = vmor %vm295, %vm455
        %vm520 = vmor %vm296, %vm456
        %vm521 = vmor %vm297, %vm457
        %vm522 = vmor %vm298, %vm458
        %vm523 = vmor %vm299, %vm459
        %vm524 = vmor %vm300, %vm460
        %vm525 = vmor %vm301, %vm461
        %vm526 = vmor %vm302, %vm462
        %vm527 = vmor %vm303, %vm463
        %vm528 = vmor %vm304, %vm464
        %vm529 = vmor %vm305, %vm465
        %vm530 = vmor %vm306, %vm466
        %vm531 = vmor %vm307, %vm467
        %vm532 = vmor %vm308, %vm468
        %vm533 = vmor %vm309, %vm469
        %vm534 = vmor %vm310, %vm470
        %vm535 = vmor %vm311, %vm471
        %vm536 = vmor %vm312, %vm472
        %vm537 = vmor %vm313, %vm473
        %vm538 = vmor %vm314, %vm474
        %vm539 = vmor %vm315, %vm475
        %vm540 = vmor %vm316, %vm476
        %vm541 = vmor %vm317, %vm477
        %vm542 = vmor %vm318, %vm478
        %vm543 = vmor %vm319, %vm479
        %vm544 = vmor %vm320, %vm480
        %vm545 = vmor %vm321, %vm481
        %vm546 = vmor %vm322, %vm482
        %vm547 = vmor %vm323, %vm483
        %vm548 = vmor %vm324, %vm484
        %vm549 = vmor %vm325, %vm485
        %vm550 = vmor %vm326, %vm486
        %vm551 = vmor %vm327, %vm487
        %vm552 = vmor %vm328, %vm488
        %vm553 = vmor %vm329, %vm489
        %vm554 = vmor %vm330, %vm490
        %vm555 = vmor %vm331, %vm491
        %vm556 = vmor %vm332, %vm492
        %vm557 = vmor %vm333, %vm493
        %vm558 = vmor %vm334, %vm494
        %vm559 = vmor %vm335, %vm495
        %vm560 = vmor %vm336, %vm496
        %vm561 = vmor %vm337, %vm497
        %vm562 = vmor %vm338, %vm498
        %vm563 = vmor %vm339, %vm499
        %vm564 = vmor %vm340, %vm500
        %565 = vset.pattern.permute.xlu0 2
        %566 = vperm.xlu0 %565, %v146
        %v567 = vpop.permute.xlu0 %566
        %568 = vset.pattern.permute.xlu0 2
        %569 = vperm.xlu0 %568, %v147
        %v570 = vpop.permute.xlu0 %569
        %571 = vset.pattern.permute.xlu0 2
        %572 = vperm.xlu0 %571, %v148
        %v573 = vpop.permute.xlu0 %572
        %574 = vset.pattern.permute.xlu0 2
        %575 = vperm.xlu0 %574, %v149
        %v576 = vpop.permute.xlu0 %575
        %577 = vset.pattern.permute.xlu0 2
        %578 = vperm.xlu0 %577, %v150
        %v579 = vpop.permute.xlu0 %578
        %580 = vset.pattern.permute.xlu0 2
        %581 = vperm.xlu0 %580, %v151
        %v582 = vpop.permute.xlu0 %581
        %583 = vset.pattern.permute.xlu0 2
        %584 = vperm.xlu0 %583, %v152
        %v585 = vpop.permute.xlu0 %584
        %586 = vset.pattern.permute.xlu0 2
        %587 = vperm.xlu0 %586, %v153
        %v588 = vpop.permute.xlu0 %587
        %589 = vset.pattern.permute.xlu0 2
        %590 = vperm.xlu0 %589, %v154
        %v591 = vpop.permute.xlu0 %590
        %592 = vset.pattern.permute.xlu0 2
        %593 = vperm.xlu0 %592, %v155
        %v594 = vpop.permute.xlu0 %593
        %595 = vset.pattern.permute.xlu0 2
        %596 = vperm.xlu0 %595, %v156
        %v597 = vpop.permute.xlu0 %596
        %598 = vset.pattern.permute.xlu0 2
        %599 = vperm.xlu0 %598, %v157
        %v600 = vpop.permute.xlu0 %599
        %601 = vset.pattern.permute.xlu0 2
        %602 = vperm.xlu0 %601, %v158
        %v603 = vpop.permute.xlu0 %602
        %604 = vset.pattern.permute.xlu0 2
        %605 = vperm.xlu0 %604, %v159
        %v606 = vpop.permute.xlu0 %605
        %607 = vset.pattern.permute.xlu0 2
        %608 = vperm.xlu0 %607, %v160
        %v609 = vpop.permute.xlu0 %608
        %610 = vset.pattern.permute.xlu0 2
        %611 = vperm.xlu0 %610, %v161
        %v612 = vpop.permute.xlu0 %611
        %613 = vset.pattern.permute.xlu0 2
        %614 = vperm.xlu0 %613, %v162
        %v615 = vpop.permute.xlu0 %614
        %616 = vset.pattern.permute.xlu0 2
        %617 = vperm.xlu0 %616, %v163
        %v618 = vpop.permute.xlu0 %617
        %619 = vset.pattern.permute.xlu0 2
        %620 = vperm.xlu0 %619, %v164
        %v621 = vpop.permute.xlu0 %620
        %622 = vset.pattern.permute.xlu0 2
        %623 = vperm.xlu0 %622, %v165
        %v624 = vpop.permute.xlu0 %623
        %625 = vset.pattern.permute.xlu0 2
        %626 = vperm.xlu0 %625, %v166
        %v627 = vpop.permute.xlu0 %626
        %628 = vset.pattern.permute.xlu0 2
        %629 = vperm.xlu0 %628, %v167
        %v630 = vpop.permute.xlu0 %629
        %631 = vset.pattern.permute.xlu0 2
        %632 = vperm.xlu0 %631, %v168
        %v633 = vpop.permute.xlu0 %632
        %634 = vset.pattern.permute.xlu0 2
        %635 = vperm.xlu0 %634, %v169
        %v636 = vpop.permute.xlu0 %635
        %637 = vset.pattern.permute.xlu0 2
        %638 = vperm.xlu0 %637, %v170
        %v639 = vpop.permute.xlu0 %638
        %640 = vset.pattern.permute.xlu0 2
        %641 = vperm.xlu0 %640, %v171
        %v642 = vpop.permute.xlu0 %641
        %643 = vset.pattern.permute.xlu0 2
        %644 = vperm.xlu0 %643, %v172
        %v645 = vpop.permute.xlu0 %644
        %646 = vset.pattern.permute.xlu0 2
        %647 = vperm.xlu0 %646, %v173
        %v648 = vpop.permute.xlu0 %647
        %649 = vset.pattern.permute.xlu0 2
        %650 = vperm.xlu0 %649, %v174
        %v651 = vpop.permute.xlu0 %650
        %652 = vset.pattern.permute.xlu0 2
        %653 = vperm.xlu0 %652, %v175
        %v654 = vpop.permute.xlu0 %653
        %655 = vset.pattern.permute.xlu0 2
        %656 = vperm.xlu0 %655, %v176
        %v657 = vpop.permute.xlu0 %656
        %658 = vset.pattern.permute.xlu0 2
        %659 = vperm.xlu0 %658, %v177
        %v660 = vpop.permute.xlu0 %659
        %vm661 = vcmp.eq.s32.totalorder %v179, %v567
        %vm662 = vcmp.eq.s32.totalorder %v180, %v567
        %vm663 = vcmp.eq.s32.totalorder %v179, %v570
        %vm664 = vcmp.eq.s32.totalorder %v180, %v570
        %vm665 = vcmp.eq.s32.totalorder %v179, %v573
        %vm666 = vcmp.eq.s32.totalorder %v180, %v573
        %vm667 = vcmp.eq.s32.totalorder %v179, %v576
        %vm668 = vcmp.eq.s32.totalorder %v180, %v576
        %vm669 = vcmp.eq.s32.totalorder %v179, %v579
        %vm670 = vcmp.eq.s32.totalorder %v180, %v579
        %vm671 = vcmp.eq.s32.totalorder %v179, %v582
        %vm672 = vcmp.eq.s32.totalorder %v180, %v582
        %vm673 = vcmp.eq.s32.totalorder %v179, %v585
        %vm674 = vcmp.eq.s32.totalorder %v180, %v585
        %vm675 = vcmp.eq.s32.totalorder %v179, %v588
        %vm676 = vcmp.eq.s32.totalorder %v180, %v588
        %vm677 = vcmp.eq.s32.totalorder %v179, %v591
        %vm678 = vcmp.eq.s32.totalorder %v180, %v591
        %vm679 = vcmp.eq.s32.totalorder %v179, %v594
        %vm680 = vcmp.eq.s32.totalorder %v180, %v594
        %vm681 = vcmp.eq.s32.totalorder %v179, %v597
        %vm682 = vcmp.eq.s32.totalorder %v180, %v597
        %vm683 = vcmp.eq.s32.totalorder %v179, %v600
        %vm684 = vcmp.eq.s32.totalorder %v180, %v600
        %vm685 = vcmp.eq.s32.totalorder %v179, %v603
        %vm686 = vcmp.eq.s32.totalorder %v180, %v603
        %vm687 = vcmp.eq.s32.totalorder %v179, %v606
        %vm688 = vcmp.eq.s32.totalorder %v180, %v606
        %vm689 = vcmp.eq.s32.totalorder %v179, %v609
        %vm690 = vcmp.eq.s32.totalorder %v180, %v609
        %vm691 = vcmp.eq.s32.totalorder %v179, %v612
        %vm692 = vcmp.eq.s32.totalorder %v180, %v612
        %vm693 = vcmp.eq.s32.totalorder %v179, %v615
        %vm694 = vcmp.eq.s32.totalorder %v180, %v615
        %vm695 = vcmp.eq.s32.totalorder %v179, %v618
        %vm696 = vcmp.eq.s32.totalorder %v180, %v618
        %vm697 = vcmp.eq.s32.totalorder %v179, %v621
        %vm698 = vcmp.eq.s32.totalorder %v180, %v621
        %vm699 = vcmp.eq.s32.totalorder %v179, %v624
        %vm700 = vcmp.eq.s32.totalorder %v180, %v624
        %vm701 = vcmp.eq.s32.totalorder %v179, %v627
        %vm702 = vcmp.eq.s32.totalorder %v180, %v627
        %vm703 = vcmp.eq.s32.totalorder %v179, %v630
        %vm704 = vcmp.eq.s32.totalorder %v180, %v630
        %vm705 = vcmp.eq.s32.totalorder %v179, %v633
        %vm706 = vcmp.eq.s32.totalorder %v180, %v633
        %vm707 = vcmp.eq.s32.totalorder %v179, %v636
        %vm708 = vcmp.eq.s32.totalorder %v180, %v636
        %vm709 = vcmp.eq.s32.totalorder %v179, %v639
        %vm710 = vcmp.eq.s32.totalorder %v180, %v639
        %vm711 = vcmp.eq.s32.totalorder %v179, %v642
        %vm712 = vcmp.eq.s32.totalorder %v180, %v642
        %vm713 = vcmp.eq.s32.totalorder %v179, %v645
        %vm714 = vcmp.eq.s32.totalorder %v180, %v645
        %vm715 = vcmp.eq.s32.totalorder %v179, %v648
        %vm716 = vcmp.eq.s32.totalorder %v180, %v648
        %vm717 = vcmp.eq.s32.totalorder %v179, %v651
        %vm718 = vcmp.eq.s32.totalorder %v180, %v651
        %vm719 = vcmp.eq.s32.totalorder %v179, %v654
        %vm720 = vcmp.eq.s32.totalorder %v180, %v654
        %vm721 = vcmp.eq.s32.totalorder %v179, %v657
        %vm722 = vcmp.eq.s32.totalorder %v180, %v657
        %vm723 = vcmp.eq.s32.totalorder %v179, %v660
        %vm724 = vcmp.eq.s32.totalorder %v180, %v660
        %vm725 = vmor %vm501, %vm661
        %vm726 = vmor %vm502, %vm662
        %vm727 = vmor %vm503, %vm663
        %vm728 = vmor %vm504, %vm664
        %vm729 = vmor %vm505, %vm665
        %vm730 = vmor %vm506, %vm666
        %vm731 = vmor %vm507, %vm667
        %vm732 = vmor %vm508, %vm668
        %vm733 = vmor %vm509, %vm669
        %vm734 = vmor %vm510, %vm670
        %vm735 = vmor %vm511, %vm671
        %vm736 = vmor %vm512, %vm672
        %vm737 = vmor %vm513, %vm673
        %vm738 = vmor %vm514, %vm674
        %vm739 = vmor %vm515, %vm675
        %vm740 = vmor %vm516, %vm676
        %vm741 = vmor %vm517, %vm677
        %vm742 = vmor %vm518, %vm678
        %vm743 = vmor %vm519, %vm679
        %vm744 = vmor %vm520, %vm680
        %vm745 = vmor %vm521, %vm681
        %vm746 = vmor %vm522, %vm682
        %vm747 = vmor %vm523, %vm683
        %vm748 = vmor %vm524, %vm684
        %vm749 = vmor %vm525, %vm685
        %vm750 = vmor %vm526, %vm686
        %vm751 = vmor %vm527, %vm687
        %vm752 = vmor %vm528, %vm688
        %vm753 = vmor %vm529, %vm689
        %vm754 = vmor %vm530, %vm690
        %vm755 = vmor %vm531, %vm691
        %vm756 = vmor %vm532, %vm692
        %vm757 = vmor %vm533, %vm693
        %vm758 = vmor %vm534, %vm694
        %vm759 = vmor %vm535, %vm695
        %vm760 = vmor %vm536, %vm696
        %vm761 = vmor %vm537, %vm697
        %vm762 = vmor %vm538, %vm698
        %vm763 = vmor %vm539, %vm699
        %vm764 = vmor %vm540, %vm700
        %vm765 = vmor %vm541, %vm701
        %vm766 = vmor %vm542, %vm702
        %vm767 = vmor %vm543, %vm703
        %vm768 = vmor %vm544, %vm704
        %vm769 = vmor %vm545, %vm705
        %vm770 = vmor %vm546, %vm706
        %vm771 = vmor %vm547, %vm707
        %vm772 = vmor %vm548, %vm708
        %vm773 = vmor %vm549, %vm709
        %vm774 = vmor %vm550, %vm710
        %vm775 = vmor %vm551, %vm711
        %vm776 = vmor %vm552, %vm712
        %vm777 = vmor %vm553, %vm713
        %vm778 = vmor %vm554, %vm714
        %vm779 = vmor %vm555, %vm715
        %vm780 = vmor %vm556, %vm716
        %vm781 = vmor %vm557, %vm717
        %vm782 = vmor %vm558, %vm718
        %vm783 = vmor %vm559, %vm719
        %vm784 = vmor %vm560, %vm720
        %vm785 = vmor %vm561, %vm721
        %vm786 = vmor %vm562, %vm722
        %vm787 = vmor %vm563, %vm723
        %vm788 = vmor %vm564, %vm724
        %789 = vset.pattern.permute.xlu0 3
        %790 = vperm.xlu0 %789, %v146
        %v791 = vpop.permute.xlu0 %790
        %792 = vset.pattern.permute.xlu0 3
        %793 = vperm.xlu0 %792, %v147
        %v794 = vpop.permute.xlu0 %793
        %795 = vset.pattern.permute.xlu0 3
        %796 = vperm.xlu0 %795, %v148
        %v797 = vpop.permute.xlu0 %796
        %798 = vset.pattern.permute.xlu0 3
        %799 = vperm.xlu0 %798, %v149
        %v800 = vpop.permute.xlu0 %799
        %801 = vset.pattern.permute.xlu0 3
        %802 = vperm.xlu0 %801, %v150
        %v803 = vpop.permute.xlu0 %802
        %804 = vset.pattern.permute.xlu0 3
        %805 = vperm.xlu0 %804, %v151
        %v806 = vpop.permute.xlu0 %805
        %807 = vset.pattern.permute.xlu0 3
        %808 = vperm.xlu0 %807, %v152
        %v809 = vpop.permute.xlu0 %808
        %810 = vset.pattern.permute.xlu0 3
        %811 = vperm.xlu0 %810, %v153
        %v812 = vpop.permute.xlu0 %811
        %813 = vset.pattern.permute.xlu0 3
        %814 = vperm.xlu0 %813, %v154
        %v815 = vpop.permute.xlu0 %814
        %816 = vset.pattern.permute.xlu0 3
        %817 = vperm.xlu0 %816, %v155
        %v818 = vpop.permute.xlu0 %817
        %819 = vset.pattern.permute.xlu0 3
        %820 = vperm.xlu0 %819, %v156
        %v821 = vpop.permute.xlu0 %820
        %822 = vset.pattern.permute.xlu0 3
        %823 = vperm.xlu0 %822, %v157
        %v824 = vpop.permute.xlu0 %823
        %825 = vset.pattern.permute.xlu0 3
        %826 = vperm.xlu0 %825, %v158
        %v827 = vpop.permute.xlu0 %826
        %828 = vset.pattern.permute.xlu0 3
        %829 = vperm.xlu0 %828, %v159
        %v830 = vpop.permute.xlu0 %829
        %831 = vset.pattern.permute.xlu0 3
        %832 = vperm.xlu0 %831, %v160
        %v833 = vpop.permute.xlu0 %832
        %834 = vset.pattern.permute.xlu0 3
        %835 = vperm.xlu0 %834, %v161
        %v836 = vpop.permute.xlu0 %835
        %837 = vset.pattern.permute.xlu0 3
        %838 = vperm.xlu0 %837, %v162
        %v839 = vpop.permute.xlu0 %838
        %840 = vset.pattern.permute.xlu0 3
        %841 = vperm.xlu0 %840, %v163
        %v842 = vpop.permute.xlu0 %841
        %843 = vset.pattern.permute.xlu0 3
        %844 = vperm.xlu0 %843, %v164
        %v845 = vpop.permute.xlu0 %844
        %846 = vset.pattern.permute.xlu0 3
        %847 = vperm.xlu0 %846, %v165
        %v848 = vpop.permute.xlu0 %847
        %849 = vset.pattern.permute.xlu0 3
        %850 = vperm.xlu0 %849, %v166
        %v851 = vpop.permute.xlu0 %850
        %852 = vset.pattern.permute.xlu0 3
        %853 = vperm.xlu0 %852, %v167
        %v854 = vpop.permute.xlu0 %853
        %855 = vset.pattern.permute.xlu0 3
        %856 = vperm.xlu0 %855, %v168
        %v857 = vpop.permute.xlu0 %856
        %858 = vset.pattern.permute.xlu0 3
        %859 = vperm.xlu0 %858, %v169
        %v860 = vpop.permute.xlu0 %859
        %861 = vset.pattern.permute.xlu0 3
        %862 = vperm.xlu0 %861, %v170
        %v863 = vpop.permute.xlu0 %862
        %864 = vset.pattern.permute.xlu0 3
        %865 = vperm.xlu0 %864, %v171
        %v866 = vpop.permute.xlu0 %865
        %867 = vset.pattern.permute.xlu0 3
        %868 = vperm.xlu0 %867, %v172
        %v869 = vpop.permute.xlu0 %868
        %870 = vset.pattern.permute.xlu0 3
        %871 = vperm.xlu0 %870, %v173
        %v872 = vpop.permute.xlu0 %871
        %873 = vset.pattern.permute.xlu0 3
        %874 = vperm.xlu0 %873, %v174
        %v875 = vpop.permute.xlu0 %874
        %876 = vset.pattern.permute.xlu0 3
        %877 = vperm.xlu0 %876, %v175
        %v878 = vpop.permute.xlu0 %877
        %879 = vset.pattern.permute.xlu0 3
        %880 = vperm.xlu0 %879, %v176
        %v881 = vpop.permute.xlu0 %880
        %882 = vset.pattern.permute.xlu0 3
        %883 = vperm.xlu0 %882, %v177
        %v884 = vpop.permute.xlu0 %883
        %vm885 = vcmp.eq.s32.totalorder %v179, %v791
        %vm886 = vcmp.eq.s32.totalorder %v180, %v791
        %vm887 = vcmp.eq.s32.totalorder %v179, %v794
        %vm888 = vcmp.eq.s32.totalorder %v180, %v794
        %vm889 = vcmp.eq.s32.totalorder %v179, %v797
        %vm890 = vcmp.eq.s32.totalorder %v180, %v797
        %vm891 = vcmp.eq.s32.totalorder %v179, %v800
        %vm892 = vcmp.eq.s32.totalorder %v180, %v800
        %vm893 = vcmp.eq.s32.totalorder %v179, %v803
        %vm894 = vcmp.eq.s32.totalorder %v180, %v803
        %vm895 = vcmp.eq.s32.totalorder %v179, %v806
        %vm896 = vcmp.eq.s32.totalorder %v180, %v806
        %vm897 = vcmp.eq.s32.totalorder %v179, %v809
        %vm898 = vcmp.eq.s32.totalorder %v180, %v809
        %vm899 = vcmp.eq.s32.totalorder %v179, %v812
        %vm900 = vcmp.eq.s32.totalorder %v180, %v812
        %vm901 = vcmp.eq.s32.totalorder %v179, %v815
        %vm902 = vcmp.eq.s32.totalorder %v180, %v815
        %vm903 = vcmp.eq.s32.totalorder %v179, %v818
        %vm904 = vcmp.eq.s32.totalorder %v180, %v818
        %vm905 = vcmp.eq.s32.totalorder %v179, %v821
        %vm906 = vcmp.eq.s32.totalorder %v180, %v821
        %vm907 = vcmp.eq.s32.totalorder %v179, %v824
        %vm908 = vcmp.eq.s32.totalorder %v180, %v824
        %vm909 = vcmp.eq.s32.totalorder %v179, %v827
        %vm910 = vcmp.eq.s32.totalorder %v180, %v827
        %vm911 = vcmp.eq.s32.totalorder %v179, %v830
        %vm912 = vcmp.eq.s32.totalorder %v180, %v830
        %vm913 = vcmp.eq.s32.totalorder %v179, %v833
        %vm914 = vcmp.eq.s32.totalorder %v180, %v833
        %vm915 = vcmp.eq.s32.totalorder %v179, %v836
        %vm916 = vcmp.eq.s32.totalorder %v180, %v836
        %vm917 = vcmp.eq.s32.totalorder %v179, %v839
        %vm918 = vcmp.eq.s32.totalorder %v180, %v839
        %vm919 = vcmp.eq.s32.totalorder %v179, %v842
        %vm920 = vcmp.eq.s32.totalorder %v180, %v842
        %vm921 = vcmp.eq.s32.totalorder %v179, %v845
        %vm922 = vcmp.eq.s32.totalorder %v180, %v845
        %vm923 = vcmp.eq.s32.totalorder %v179, %v848
        %vm924 = vcmp.eq.s32.totalorder %v180, %v848
        %vm925 = vcmp.eq.s32.totalorder %v179, %v851
        %vm926 = vcmp.eq.s32.totalorder %v180, %v851
        %vm927 = vcmp.eq.s32.totalorder %v179, %v854
        %vm928 = vcmp.eq.s32.totalorder %v180, %v854
        %vm929 = vcmp.eq.s32.totalorder %v179, %v857
        %vm930 = vcmp.eq.s32.totalorder %v180, %v857
        %vm931 = vcmp.eq.s32.totalorder %v179, %v860
        %vm932 = vcmp.eq.s32.totalorder %v180, %v860
        %vm933 = vcmp.eq.s32.totalorder %v179, %v863
        %vm934 = vcmp.eq.s32.totalorder %v180, %v863
        %vm935 = vcmp.eq.s32.totalorder %v179, %v866
        %vm936 = vcmp.eq.s32.totalorder %v180, %v866
        %vm937 = vcmp.eq.s32.totalorder %v179, %v869
        %vm938 = vcmp.eq.s32.totalorder %v180, %v869
        %vm939 = vcmp.eq.s32.totalorder %v179, %v872
        %vm940 = vcmp.eq.s32.totalorder %v180, %v872
        %vm941 = vcmp.eq.s32.totalorder %v179, %v875
        %vm942 = vcmp.eq.s32.totalorder %v180, %v875
        %vm943 = vcmp.eq.s32.totalorder %v179, %v878
        %vm944 = vcmp.eq.s32.totalorder %v180, %v878
        %vm945 = vcmp.eq.s32.totalorder %v179, %v881
        %vm946 = vcmp.eq.s32.totalorder %v180, %v881
        %vm947 = vcmp.eq.s32.totalorder %v179, %v884
        %vm948 = vcmp.eq.s32.totalorder %v180, %v884
        %vm949 = vmor %vm725, %vm885
        %vm950 = vmor %vm726, %vm886
        %vm951 = vmor %vm727, %vm887
        %vm952 = vmor %vm728, %vm888
        %vm953 = vmor %vm729, %vm889
        %vm954 = vmor %vm730, %vm890
        %vm955 = vmor %vm731, %vm891
        %vm956 = vmor %vm732, %vm892
        %vm957 = vmor %vm733, %vm893
        %vm958 = vmor %vm734, %vm894
        %vm959 = vmor %vm735, %vm895
        %vm960 = vmor %vm736, %vm896
        %vm961 = vmor %vm737, %vm897
        %vm962 = vmor %vm738, %vm898
        %vm963 = vmor %vm739, %vm899
        %vm964 = vmor %vm740, %vm900
        %vm965 = vmor %vm741, %vm901
        %vm966 = vmor %vm742, %vm902
        %vm967 = vmor %vm743, %vm903
        %vm968 = vmor %vm744, %vm904
        %vm969 = vmor %vm745, %vm905
        %vm970 = vmor %vm746, %vm906
        %vm971 = vmor %vm747, %vm907
        %vm972 = vmor %vm748, %vm908
        %vm973 = vmor %vm749, %vm909
        %vm974 = vmor %vm750, %vm910
        %vm975 = vmor %vm751, %vm911
        %vm976 = vmor %vm752, %vm912
        %vm977 = vmor %vm753, %vm913
        %vm978 = vmor %vm754, %vm914
        %vm979 = vmor %vm755, %vm915
        %vm980 = vmor %vm756, %vm916
        %vm981 = vmor %vm757, %vm917
        %vm982 = vmor %vm758, %vm918
        %vm983 = vmor %vm759, %vm919
        %vm984 = vmor %vm760, %vm920
        %vm985 = vmor %vm761, %vm921
        %vm986 = vmor %vm762, %vm922
        %vm987 = vmor %vm763, %vm923
        %vm988 = vmor %vm764, %vm924
        %vm989 = vmor %vm765, %vm925
        %vm990 = vmor %vm766, %vm926
        %vm991 = vmor %vm767, %vm927
        %vm992 = vmor %vm768, %vm928
        %vm993 = vmor %vm769, %vm929
        %vm994 = vmor %vm770, %vm930
        %vm995 = vmor %vm771, %vm931
        %vm996 = vmor %vm772, %vm932
        %vm997 = vmor %vm773, %vm933
        %vm998 = vmor %vm774, %vm934
        %vm999 = vmor %vm775, %vm935
        %vm1000 = vmor %vm776, %vm936
        %vm1001 = vmor %vm777, %vm937
        %vm1002 = vmor %vm778, %vm938
        %vm1003 = vmor %vm779, %vm939
        %vm1004 = vmor %vm780, %vm940
        %vm1005 = vmor %vm781, %vm941
        %vm1006 = vmor %vm782, %vm942
        %vm1007 = vmor %vm783, %vm943
        %vm1008 = vmor %vm784, %vm944
        %vm1009 = vmor %vm785, %vm945
        %vm1010 = vmor %vm786, %vm946
        %vm1011 = vmor %vm787, %vm947
        %vm1012 = vmor %vm788, %vm948
        %1013 = vset.pattern.permute.xlu0 4
        %1014 = vperm.xlu0 %1013, %v146
        %v1015 = vpop.permute.xlu0 %1014
        %1016 = vset.pattern.permute.xlu0 4
        %1017 = vperm.xlu0 %1016, %v147
        %v1018 = vpop.permute.xlu0 %1017
        %1019 = vset.pattern.permute.xlu0 4
        %1020 = vperm.xlu0 %1019, %v148
        %v1021 = vpop.permute.xlu0 %1020
        %1022 = vset.pattern.permute.xlu0 4
        %1023 = vperm.xlu0 %1022, %v149
        %v1024 = vpop.permute.xlu0 %1023
        %1025 = vset.pattern.permute.xlu0 4
        %1026 = vperm.xlu0 %1025, %v150
        %v1027 = vpop.permute.xlu0 %1026
        %1028 = vset.pattern.permute.xlu0 4
        %1029 = vperm.xlu0 %1028, %v151
        %v1030 = vpop.permute.xlu0 %1029
        %1031 = vset.pattern.permute.xlu0 4
        %1032 = vperm.xlu0 %1031, %v152
        %v1033 = vpop.permute.xlu0 %1032
        %1034 = vset.pattern.permute.xlu0 4
        %1035 = vperm.xlu0 %1034, %v153
        %v1036 = vpop.permute.xlu0 %1035
        %1037 = vset.pattern.permute.xlu0 4
        %1038 = vperm.xlu0 %1037, %v154
        %v1039 = vpop.permute.xlu0 %1038
        %1040 = vset.pattern.permute.xlu0 4
        %1041 = vperm.xlu0 %1040, %v155
        %v1042 = vpop.permute.xlu0 %1041
        %1043 = vset.pattern.permute.xlu0 4
        %1044 = vperm.xlu0 %1043, %v156
        %v1045 = vpop.permute.xlu0 %1044
        %1046 = vset.pattern.permute.xlu0 4
        %1047 = vperm.xlu0 %1046, %v157
        %v1048 = vpop.permute.xlu0 %1047
        %1049 = vset.pattern.permute.xlu0 4
        %1050 = vperm.xlu0 %1049, %v158
        %v1051 = vpop.permute.xlu0 %1050
        %1052 = vset.pattern.permute.xlu0 4
        %1053 = vperm.xlu0 %1052, %v159
        %v1054 = vpop.permute.xlu0 %1053
        %1055 = vset.pattern.permute.xlu0 4
        %1056 = vperm.xlu0 %1055, %v160
        %v1057 = vpop.permute.xlu0 %1056
        %1058 = vset.pattern.permute.xlu0 4
        %1059 = vperm.xlu0 %1058, %v161
        %v1060 = vpop.permute.xlu0 %1059
        %1061 = vset.pattern.permute.xlu0 4
        %1062 = vperm.xlu0 %1061, %v162
        %v1063 = vpop.permute.xlu0 %1062
        %1064 = vset.pattern.permute.xlu0 4
        %1065 = vperm.xlu0 %1064, %v163
        %v1066 = vpop.permute.xlu0 %1065
        %1067 = vset.pattern.permute.xlu0 4
        %1068 = vperm.xlu0 %1067, %v164
        %v1069 = vpop.permute.xlu0 %1068
        %1070 = vset.pattern.permute.xlu0 4
        %1071 = vperm.xlu0 %1070, %v165
        %v1072 = vpop.permute.xlu0 %1071
        %1073 = vset.pattern.permute.xlu0 4
        %1074 = vperm.xlu0 %1073, %v166
        %v1075 = vpop.permute.xlu0 %1074
        %1076 = vset.pattern.permute.xlu0 4
        %1077 = vperm.xlu0 %1076, %v167
        %v1078 = vpop.permute.xlu0 %1077
        %1079 = vset.pattern.permute.xlu0 4
        %1080 = vperm.xlu0 %1079, %v168
        %v1081 = vpop.permute.xlu0 %1080
        %1082 = vset.pattern.permute.xlu0 4
        %1083 = vperm.xlu0 %1082, %v169
        %v1084 = vpop.permute.xlu0 %1083
        %1085 = vset.pattern.permute.xlu0 4
        %1086 = vperm.xlu0 %1085, %v170
        %v1087 = vpop.permute.xlu0 %1086
        %1088 = vset.pattern.permute.xlu0 4
        %1089 = vperm.xlu0 %1088, %v171
        %v1090 = vpop.permute.xlu0 %1089
        %1091 = vset.pattern.permute.xlu0 4
        %1092 = vperm.xlu0 %1091, %v172
        %v1093 = vpop.permute.xlu0 %1092
        %1094 = vset.pattern.permute.xlu0 4
        %1095 = vperm.xlu0 %1094, %v173
        %v1096 = vpop.permute.xlu0 %1095
        %1097 = vset.pattern.permute.xlu0 4
        %1098 = vperm.xlu0 %1097, %v174
        %v1099 = vpop.permute.xlu0 %1098
        %1100 = vset.pattern.permute.xlu0 4
        %1101 = vperm.xlu0 %1100, %v175
        %v1102 = vpop.permute.xlu0 %1101
        %1103 = vset.pattern.permute.xlu0 4
        %1104 = vperm.xlu0 %1103, %v176
        %v1105 = vpop.permute.xlu0 %1104
        %1106 = vset.pattern.permute.xlu0 4
        %1107 = vperm.xlu0 %1106, %v177
        %v1108 = vpop.permute.xlu0 %1107
        %vm1109 = vcmp.eq.s32.totalorder %v179, %v1015
        %vm1110 = vcmp.eq.s32.totalorder %v180, %v1015
        %vm1111 = vcmp.eq.s32.totalorder %v179, %v1018
        %vm1112 = vcmp.eq.s32.totalorder %v180, %v1018
        %vm1113 = vcmp.eq.s32.totalorder %v179, %v1021
        %vm1114 = vcmp.eq.s32.totalorder %v180, %v1021
        %vm1115 = vcmp.eq.s32.totalorder %v179, %v1024
        %vm1116 = vcmp.eq.s32.totalorder %v180, %v1024
        %vm1117 = vcmp.eq.s32.totalorder %v179, %v1027
        %vm1118 = vcmp.eq.s32.totalorder %v180, %v1027
        %vm1119 = vcmp.eq.s32.totalorder %v179, %v1030
        %vm1120 = vcmp.eq.s32.totalorder %v180, %v1030
        %vm1121 = vcmp.eq.s32.totalorder %v179, %v1033
        %vm1122 = vcmp.eq.s32.totalorder %v180, %v1033
        %vm1123 = vcmp.eq.s32.totalorder %v179, %v1036
        %vm1124 = vcmp.eq.s32.totalorder %v180, %v1036
        %vm1125 = vcmp.eq.s32.totalorder %v179, %v1039
        %vm1126 = vcmp.eq.s32.totalorder %v180, %v1039
        %vm1127 = vcmp.eq.s32.totalorder %v179, %v1042
        %vm1128 = vcmp.eq.s32.totalorder %v180, %v1042
        %vm1129 = vcmp.eq.s32.totalorder %v179, %v1045
        %vm1130 = vcmp.eq.s32.totalorder %v180, %v1045
        %vm1131 = vcmp.eq.s32.totalorder %v179, %v1048
        %vm1132 = vcmp.eq.s32.totalorder %v180, %v1048
        %vm1133 = vcmp.eq.s32.totalorder %v179, %v1051
        %vm1134 = vcmp.eq.s32.totalorder %v180, %v1051
        %vm1135 = vcmp.eq.s32.totalorder %v179, %v1054
        %vm1136 = vcmp.eq.s32.totalorder %v180, %v1054
        %vm1137 = vcmp.eq.s32.totalorder %v179, %v1057
        %vm1138 = vcmp.eq.s32.totalorder %v180, %v1057
        %vm1139 = vcmp.eq.s32.totalorder %v179, %v1060
        %vm1140 = vcmp.eq.s32.totalorder %v180, %v1060
        %vm1141 = vcmp.eq.s32.totalorder %v179, %v1063
        %vm1142 = vcmp.eq.s32.totalorder %v180, %v1063
        %vm1143 = vcmp.eq.s32.totalorder %v179, %v1066
        %vm1144 = vcmp.eq.s32.totalorder %v180, %v1066
        %vm1145 = vcmp.eq.s32.totalorder %v179, %v1069
        %vm1146 = vcmp.eq.s32.totalorder %v180, %v1069
        %vm1147 = vcmp.eq.s32.totalorder %v179, %v1072
        %vm1148 = vcmp.eq.s32.totalorder %v180, %v1072
        %vm1149 = vcmp.eq.s32.totalorder %v179, %v1075
        %vm1150 = vcmp.eq.s32.totalorder %v180, %v1075
        %vm1151 = vcmp.eq.s32.totalorder %v179, %v1078
        %vm1152 = vcmp.eq.s32.totalorder %v180, %v1078
        %vm1153 = vcmp.eq.s32.totalorder %v179, %v1081
        %vm1154 = vcmp.eq.s32.totalorder %v180, %v1081
        %vm1155 = vcmp.eq.s32.totalorder %v179, %v1084
        %vm1156 = vcmp.eq.s32.totalorder %v180, %v1084
        %vm1157 = vcmp.eq.s32.totalorder %v179, %v1087
        %vm1158 = vcmp.eq.s32.totalorder %v180, %v1087
        %vm1159 = vcmp.eq.s32.totalorder %v179, %v1090
        %vm1160 = vcmp.eq.s32.totalorder %v180, %v1090
        %vm1161 = vcmp.eq.s32.totalorder %v179, %v1093
        %vm1162 = vcmp.eq.s32.totalorder %v180, %v1093
        %vm1163 = vcmp.eq.s32.totalorder %v179, %v1096
        %vm1164 = vcmp.eq.s32.totalorder %v180, %v1096
        %vm1165 = vcmp.eq.s32.totalorder %v179, %v1099
        %vm1166 = vcmp.eq.s32.totalorder %v180, %v1099
        %vm1167 = vcmp.eq.s32.totalorder %v179, %v1102
        %vm1168 = vcmp.eq.s32.totalorder %v180, %v1102
        %vm1169 = vcmp.eq.s32.totalorder %v179, %v1105
        %vm1170 = vcmp.eq.s32.totalorder %v180, %v1105
        %vm1171 = vcmp.eq.s32.totalorder %v179, %v1108
        %vm1172 = vcmp.eq.s32.totalorder %v180, %v1108
        %vm1173 = vmor %vm949, %vm1109
        %vm1174 = vmor %vm950, %vm1110
        %vm1175 = vmor %vm951, %vm1111
        %vm1176 = vmor %vm952, %vm1112
        %vm1177 = vmor %vm953, %vm1113
        %vm1178 = vmor %vm954, %vm1114
        %vm1179 = vmor %vm955, %vm1115
        %vm1180 = vmor %vm956, %vm1116
        %vm1181 = vmor %vm957, %vm1117
        %vm1182 = vmor %vm958, %vm1118
        %vm1183 = vmor %vm959, %vm1119
        %vm1184 = vmor %vm960, %vm1120
        %vm1185 = vmor %vm961, %vm1121
        %vm1186 = vmor %vm962, %vm1122
        %vm1187 = vmor %vm963, %vm1123
        %vm1188 = vmor %vm964, %vm1124
        %vm1189 = vmor %vm965, %vm1125
        %vm1190 = vmor %vm966, %vm1126
        %vm1191 = vmor %vm967, %vm1127
        %vm1192 = vmor %vm968, %vm1128
        %vm1193 = vmor %vm969, %vm1129
        %vm1194 = vmor %vm970, %vm1130
        %vm1195 = vmor %vm971, %vm1131
        %vm1196 = vmor %vm972, %vm1132
        %vm1197 = vmor %vm973, %vm1133
        %vm1198 = vmor %vm974, %vm1134
        %vm1199 = vmor %vm975, %vm1135
        %vm1200 = vmor %vm976, %vm1136
        %vm1201 = vmor %vm977, %vm1137
        %vm1202 = vmor %vm978, %vm1138
        %vm1203 = vmor %vm979, %vm1139
        %vm1204 = vmor %vm980, %vm1140
        %vm1205 = vmor %vm981, %vm1141
        %vm1206 = vmor %vm982, %vm1142
        %vm1207 = vmor %vm983, %vm1143
        %vm1208 = vmor %vm984, %vm1144
        %vm1209 = vmor %vm985, %vm1145
        %vm1210 = vmor %vm986, %vm1146
        %vm1211 = vmor %vm987, %vm1147
        %vm1212 = vmor %vm988, %vm1148
        %vm1213 = vmor %vm989, %vm1149
        %vm1214 = vmor %vm990, %vm1150
        %vm1215 = vmor %vm991, %vm1151
        %vm1216 = vmor %vm992, %vm1152
        %vm1217 = vmor %vm993, %vm1153
        %vm1218 = vmor %vm994, %vm1154
        %vm1219 = vmor %vm995, %vm1155
        %vm1220 = vmor %vm996, %vm1156
        %vm1221 = vmor %vm997, %vm1157
        %vm1222 = vmor %vm998, %vm1158
        %vm1223 = vmor %vm999, %vm1159
        %vm1224 = vmor %vm1000, %vm1160
        %vm1225 = vmor %vm1001, %vm1161
        %vm1226 = vmor %vm1002, %vm1162
        %vm1227 = vmor %vm1003, %vm1163
        %vm1228 = vmor %vm1004, %vm1164
        %vm1229 = vmor %vm1005, %vm1165
        %vm1230 = vmor %vm1006, %vm1166
        %vm1231 = vmor %vm1007, %vm1167
        %vm1232 = vmor %vm1008, %vm1168
        %vm1233 = vmor %vm1009, %vm1169
        %vm1234 = vmor %vm1010, %vm1170
        %vm1235 = vmor %vm1011, %vm1171
        %vm1236 = vmor %vm1012, %vm1172
        %1237 = vset.pattern.permute.xlu0 5
        %1238 = vperm.xlu0 %1237, %v146
        %v1239 = vpop.permute.xlu0 %1238
        %1240 = vset.pattern.permute.xlu0 5
        %1241 = vperm.xlu0 %1240, %v147
        %v1242 = vpop.permute.xlu0 %1241
        %1243 = vset.pattern.permute.xlu0 5
        %1244 = vperm.xlu0 %1243, %v148
        %v1245 = vpop.permute.xlu0 %1244
        %1246 = vset.pattern.permute.xlu0 5
        %1247 = vperm.xlu0 %1246, %v149
        %v1248 = vpop.permute.xlu0 %1247
        %1249 = vset.pattern.permute.xlu0 5
        %1250 = vperm.xlu0 %1249, %v150
        %v1251 = vpop.permute.xlu0 %1250
        %1252 = vset.pattern.permute.xlu0 5
        %1253 = vperm.xlu0 %1252, %v151
        %v1254 = vpop.permute.xlu0 %1253
        %1255 = vset.pattern.permute.xlu0 5
        %1256 = vperm.xlu0 %1255, %v152
        %v1257 = vpop.permute.xlu0 %1256
        %1258 = vset.pattern.permute.xlu0 5
        %1259 = vperm.xlu0 %1258, %v153
        %v1260 = vpop.permute.xlu0 %1259
        %1261 = vset.pattern.permute.xlu0 5
        %1262 = vperm.xlu0 %1261, %v154
        %v1263 = vpop.permute.xlu0 %1262
        %1264 = vset.pattern.permute.xlu0 5
        %1265 = vperm.xlu0 %1264, %v155
        %v1266 = vpop.permute.xlu0 %1265
        %1267 = vset.pattern.permute.xlu0 5
        %1268 = vperm.xlu0 %1267, %v156
        %v1269 = vpop.permute.xlu0 %1268
        %1270 = vset.pattern.permute.xlu0 5
        %1271 = vperm.xlu0 %1270, %v157
        %v1272 = vpop.permute.xlu0 %1271
        %1273 = vset.pattern.permute.xlu0 5
        %1274 = vperm.xlu0 %1273, %v158
        %v1275 = vpop.permute.xlu0 %1274
        %1276 = vset.pattern.permute.xlu0 5
        %1277 = vperm.xlu0 %1276, %v159
        %v1278 = vpop.permute.xlu0 %1277
        %1279 = vset.pattern.permute.xlu0 5
        %1280 = vperm.xlu0 %1279, %v160
        %v1281 = vpop.permute.xlu0 %1280
        %1282 = vset.pattern.permute.xlu0 5
        %1283 = vperm.xlu0 %1282, %v161
        %v1284 = vpop.permute.xlu0 %1283
        %1285 = vset.pattern.permute.xlu0 5
        %1286 = vperm.xlu0 %1285, %v162
        %v1287 = vpop.permute.xlu0 %1286
        %1288 = vset.pattern.permute.xlu0 5
        %1289 = vperm.xlu0 %1288, %v163
        %v1290 = vpop.permute.xlu0 %1289
        %1291 = vset.pattern.permute.xlu0 5
        %1292 = vperm.xlu0 %1291, %v164
        %v1293 = vpop.permute.xlu0 %1292
        %1294 = vset.pattern.permute.xlu0 5
        %1295 = vperm.xlu0 %1294, %v165
        %v1296 = vpop.permute.xlu0 %1295
        %1297 = vset.pattern.permute.xlu0 5
        %1298 = vperm.xlu0 %1297, %v166
        %v1299 = vpop.permute.xlu0 %1298
        %1300 = vset.pattern.permute.xlu0 5
        %1301 = vperm.xlu0 %1300, %v167
        %v1302 = vpop.permute.xlu0 %1301
        %1303 = vset.pattern.permute.xlu0 5
        %1304 = vperm.xlu0 %1303, %v168
        %v1305 = vpop.permute.xlu0 %1304
        %1306 = vset.pattern.permute.xlu0 5
        %1307 = vperm.xlu0 %1306, %v169
        %v1308 = vpop.permute.xlu0 %1307
        %1309 = vset.pattern.permute.xlu0 5
        %1310 = vperm.xlu0 %1309, %v170
        %v1311 = vpop.permute.xlu0 %1310
        %1312 = vset.pattern.permute.xlu0 5
        %1313 = vperm.xlu0 %1312, %v171
        %v1314 = vpop.permute.xlu0 %1313
        %1315 = vset.pattern.permute.xlu0 5
        %1316 = vperm.xlu0 %1315, %v172
        %v1317 = vpop.permute.xlu0 %1316
        %1318 = vset.pattern.permute.xlu0 5
        %1319 = vperm.xlu0 %1318, %v173
        %v1320 = vpop.permute.xlu0 %1319
        %1321 = vset.pattern.permute.xlu0 5
        %1322 = vperm.xlu0 %1321, %v174
        %v1323 = vpop.permute.xlu0 %1322
        %1324 = vset.pattern.permute.xlu0 5
        %1325 = vperm.xlu0 %1324, %v175
        %v1326 = vpop.permute.xlu0 %1325
        %1327 = vset.pattern.permute.xlu0 5
        %1328 = vperm.xlu0 %1327, %v176
        %v1329 = vpop.permute.xlu0 %1328
        %1330 = vset.pattern.permute.xlu0 5
        %1331 = vperm.xlu0 %1330, %v177
        %v1332 = vpop.permute.xlu0 %1331
        %vm1333 = vcmp.eq.s32.totalorder %v179, %v1239
        %vm1334 = vcmp.eq.s32.totalorder %v180, %v1239
        %vm1335 = vcmp.eq.s32.totalorder %v179, %v1242
        %vm1336 = vcmp.eq.s32.totalorder %v180, %v1242
        %vm1337 = vcmp.eq.s32.totalorder %v179, %v1245
        %vm1338 = vcmp.eq.s32.totalorder %v180, %v1245
        %vm1339 = vcmp.eq.s32.totalorder %v179, %v1248
        %vm1340 = vcmp.eq.s32.totalorder %v180, %v1248
        %vm1341 = vcmp.eq.s32.totalorder %v179, %v1251
        %vm1342 = vcmp.eq.s32.totalorder %v180, %v1251
        %vm1343 = vcmp.eq.s32.totalorder %v179, %v1254
        %vm1344 = vcmp.eq.s32.totalorder %v180, %v1254
        %vm1345 = vcmp.eq.s32.totalorder %v179, %v1257
        %vm1346 = vcmp.eq.s32.totalorder %v180, %v1257
        %vm1347 = vcmp.eq.s32.totalorder %v179, %v1260
        %vm1348 = vcmp.eq.s32.totalorder %v180, %v1260
        %vm1349 = vcmp.eq.s32.totalorder %v179, %v1263
        %vm1350 = vcmp.eq.s32.totalorder %v180, %v1263
        %vm1351 = vcmp.eq.s32.totalorder %v179, %v1266
        %vm1352 = vcmp.eq.s32.totalorder %v180, %v1266
        %vm1353 = vcmp.eq.s32.totalorder %v179, %v1269
        %vm1354 = vcmp.eq.s32.totalorder %v180, %v1269
        %vm1355 = vcmp.eq.s32.totalorder %v179, %v1272
        %vm1356 = vcmp.eq.s32.totalorder %v180, %v1272
        %vm1357 = vcmp.eq.s32.totalorder %v179, %v1275
        %vm1358 = vcmp.eq.s32.totalorder %v180, %v1275
        %vm1359 = vcmp.eq.s32.totalorder %v179, %v1278
        %vm1360 = vcmp.eq.s32.totalorder %v180, %v1278
        %vm1361 = vcmp.eq.s32.totalorder %v179, %v1281
        %vm1362 = vcmp.eq.s32.totalorder %v180, %v1281
        %vm1363 = vcmp.eq.s32.totalorder %v179, %v1284
        %vm1364 = vcmp.eq.s32.totalorder %v180, %v1284
        %vm1365 = vcmp.eq.s32.totalorder %v179, %v1287
        %vm1366 = vcmp.eq.s32.totalorder %v180, %v1287
        %vm1367 = vcmp.eq.s32.totalorder %v179, %v1290
        %vm1368 = vcmp.eq.s32.totalorder %v180, %v1290
        %vm1369 = vcmp.eq.s32.totalorder %v179, %v1293
        %vm1370 = vcmp.eq.s32.totalorder %v180, %v1293
        %vm1371 = vcmp.eq.s32.totalorder %v179, %v1296
        %vm1372 = vcmp.eq.s32.totalorder %v180, %v1296
        %vm1373 = vcmp.eq.s32.totalorder %v179, %v1299
        %vm1374 = vcmp.eq.s32.totalorder %v180, %v1299
        %vm1375 = vcmp.eq.s32.totalorder %v179, %v1302
        %vm1376 = vcmp.eq.s32.totalorder %v180, %v1302
        %vm1377 = vcmp.eq.s32.totalorder %v179, %v1305
        %vm1378 = vcmp.eq.s32.totalorder %v180, %v1305
        %vm1379 = vcmp.eq.s32.totalorder %v179, %v1308
        %vm1380 = vcmp.eq.s32.totalorder %v180, %v1308
        %vm1381 = vcmp.eq.s32.totalorder %v179, %v1311
        %vm1382 = vcmp.eq.s32.totalorder %v180, %v1311
        %vm1383 = vcmp.eq.s32.totalorder %v179, %v1314
        %vm1384 = vcmp.eq.s32.totalorder %v180, %v1314
        %vm1385 = vcmp.eq.s32.totalorder %v179, %v1317
        %vm1386 = vcmp.eq.s32.totalorder %v180, %v1317
        %vm1387 = vcmp.eq.s32.totalorder %v179, %v1320
        %vm1388 = vcmp.eq.s32.totalorder %v180, %v1320
        %vm1389 = vcmp.eq.s32.totalorder %v179, %v1323
        %vm1390 = vcmp.eq.s32.totalorder %v180, %v1323
        %vm1391 = vcmp.eq.s32.totalorder %v179, %v1326
        %vm1392 = vcmp.eq.s32.totalorder %v180, %v1326
        %vm1393 = vcmp.eq.s32.totalorder %v179, %v1329
        %vm1394 = vcmp.eq.s32.totalorder %v180, %v1329
        %vm1395 = vcmp.eq.s32.totalorder %v179, %v1332
        %vm1396 = vcmp.eq.s32.totalorder %v180, %v1332
        %vm1397 = vmor %vm1173, %vm1333
        %vm1398 = vmor %vm1174, %vm1334
        %vm1399 = vmor %vm1175, %vm1335
        %vm1400 = vmor %vm1176, %vm1336
        %vm1401 = vmor %vm1177, %vm1337
        %vm1402 = vmor %vm1178, %vm1338
        %vm1403 = vmor %vm1179, %vm1339
        %vm1404 = vmor %vm1180, %vm1340
        %vm1405 = vmor %vm1181, %vm1341
        %vm1406 = vmor %vm1182, %vm1342
        %vm1407 = vmor %vm1183, %vm1343
        %vm1408 = vmor %vm1184, %vm1344
        %vm1409 = vmor %vm1185, %vm1345
        %vm1410 = vmor %vm1186, %vm1346
        %vm1411 = vmor %vm1187, %vm1347
        %vm1412 = vmor %vm1188, %vm1348
        %vm1413 = vmor %vm1189, %vm1349
        %vm1414 = vmor %vm1190, %vm1350
        %vm1415 = vmor %vm1191, %vm1351
        %vm1416 = vmor %vm1192, %vm1352
        %vm1417 = vmor %vm1193, %vm1353
        %vm1418 = vmor %vm1194, %vm1354
        %vm1419 = vmor %vm1195, %vm1355
        %vm1420 = vmor %vm1196, %vm1356
        %vm1421 = vmor %vm1197, %vm1357
        %vm1422 = vmor %vm1198, %vm1358
        %vm1423 = vmor %vm1199, %vm1359
        %vm1424 = vmor %vm1200, %vm1360
        %vm1425 = vmor %vm1201, %vm1361
        %vm1426 = vmor %vm1202, %vm1362
        %vm1427 = vmor %vm1203, %vm1363
        %vm1428 = vmor %vm1204, %vm1364
        %vm1429 = vmor %vm1205, %vm1365
        %vm1430 = vmor %vm1206, %vm1366
        %vm1431 = vmor %vm1207, %vm1367
        %vm1432 = vmor %vm1208, %vm1368
        %vm1433 = vmor %vm1209, %vm1369
        %vm1434 = vmor %vm1210, %vm1370
        %vm1435 = vmor %vm1211, %vm1371
        %vm1436 = vmor %vm1212, %vm1372
        %vm1437 = vmor %vm1213, %vm1373
        %vm1438 = vmor %vm1214, %vm1374
        %vm1439 = vmor %vm1215, %vm1375
        %vm1440 = vmor %vm1216, %vm1376
        %vm1441 = vmor %vm1217, %vm1377
        %vm1442 = vmor %vm1218, %vm1378
        %vm1443 = vmor %vm1219, %vm1379
        %vm1444 = vmor %vm1220, %vm1380
        %vm1445 = vmor %vm1221, %vm1381
        %vm1446 = vmor %vm1222, %vm1382
        %vm1447 = vmor %vm1223, %vm1383
        %vm1448 = vmor %vm1224, %vm1384
        %vm1449 = vmor %vm1225, %vm1385
        %vm1450 = vmor %vm1226, %vm1386
        %vm1451 = vmor %vm1227, %vm1387
        %vm1452 = vmor %vm1228, %vm1388
        %vm1453 = vmor %vm1229, %vm1389
        %vm1454 = vmor %vm1230, %vm1390
        %vm1455 = vmor %vm1231, %vm1391
        %vm1456 = vmor %vm1232, %vm1392
        %vm1457 = vmor %vm1233, %vm1393
        %vm1458 = vmor %vm1234, %vm1394
        %vm1459 = vmor %vm1235, %vm1395
        %vm1460 = vmor %vm1236, %vm1396
        %1461 = vset.pattern.permute.xlu0 6
        %1462 = vperm.xlu0 %1461, %v146
        %v1463 = vpop.permute.xlu0 %1462
        %1464 = vset.pattern.permute.xlu0 6
        %1465 = vperm.xlu0 %1464, %v147
        %v1466 = vpop.permute.xlu0 %1465
        %1467 = vset.pattern.permute.xlu0 6
        %1468 = vperm.xlu0 %1467, %v148
        %v1469 = vpop.permute.xlu0 %1468
        %1470 = vset.pattern.permute.xlu0 6
        %1471 = vperm.xlu0 %1470, %v149
        %v1472 = vpop.permute.xlu0 %1471
        %1473 = vset.pattern.permute.xlu0 6
        %1474 = vperm.xlu0 %1473, %v150
        %v1475 = vpop.permute.xlu0 %1474
        %1476 = vset.pattern.permute.xlu0 6
        %1477 = vperm.xlu0 %1476, %v151
        %v1478 = vpop.permute.xlu0 %1477
        %1479 = vset.pattern.permute.xlu0 6
        %1480 = vperm.xlu0 %1479, %v152
        %v1481 = vpop.permute.xlu0 %1480
        %1482 = vset.pattern.permute.xlu0 6
        %1483 = vperm.xlu0 %1482, %v153
        %v1484 = vpop.permute.xlu0 %1483
        %1485 = vset.pattern.permute.xlu0 6
        %1486 = vperm.xlu0 %1485, %v154
        %v1487 = vpop.permute.xlu0 %1486
        %1488 = vset.pattern.permute.xlu0 6
        %1489 = vperm.xlu0 %1488, %v155
        %v1490 = vpop.permute.xlu0 %1489
        %1491 = vset.pattern.permute.xlu0 6
        %1492 = vperm.xlu0 %1491, %v156
        %v1493 = vpop.permute.xlu0 %1492
        %1494 = vset.pattern.permute.xlu0 6
        %1495 = vperm.xlu0 %1494, %v157
        %v1496 = vpop.permute.xlu0 %1495
        %1497 = vset.pattern.permute.xlu0 6
        %1498 = vperm.xlu0 %1497, %v158
        %v1499 = vpop.permute.xlu0 %1498
        %1500 = vset.pattern.permute.xlu0 6
        %1501 = vperm.xlu0 %1500, %v159
        %v1502 = vpop.permute.xlu0 %1501
        %1503 = vset.pattern.permute.xlu0 6
        %1504 = vperm.xlu0 %1503, %v160
        %v1505 = vpop.permute.xlu0 %1504
        %1506 = vset.pattern.permute.xlu0 6
        %1507 = vperm.xlu0 %1506, %v161
        %v1508 = vpop.permute.xlu0 %1507
        %1509 = vset.pattern.permute.xlu0 6
        %1510 = vperm.xlu0 %1509, %v162
        %v1511 = vpop.permute.xlu0 %1510
        %1512 = vset.pattern.permute.xlu0 6
        %1513 = vperm.xlu0 %1512, %v163
        %v1514 = vpop.permute.xlu0 %1513
        %1515 = vset.pattern.permute.xlu0 6
        %1516 = vperm.xlu0 %1515, %v164
        %v1517 = vpop.permute.xlu0 %1516
        %1518 = vset.pattern.permute.xlu0 6
        %1519 = vperm.xlu0 %1518, %v165
        %v1520 = vpop.permute.xlu0 %1519
        %1521 = vset.pattern.permute.xlu0 6
        %1522 = vperm.xlu0 %1521, %v166
        %v1523 = vpop.permute.xlu0 %1522
        %1524 = vset.pattern.permute.xlu0 6
        %1525 = vperm.xlu0 %1524, %v167
        %v1526 = vpop.permute.xlu0 %1525
        %1527 = vset.pattern.permute.xlu0 6
        %1528 = vperm.xlu0 %1527, %v168
        %v1529 = vpop.permute.xlu0 %1528
        %1530 = vset.pattern.permute.xlu0 6
        %1531 = vperm.xlu0 %1530, %v169
        %v1532 = vpop.permute.xlu0 %1531
        %1533 = vset.pattern.permute.xlu0 6
        %1534 = vperm.xlu0 %1533, %v170
        %v1535 = vpop.permute.xlu0 %1534
        %1536 = vset.pattern.permute.xlu0 6
        %1537 = vperm.xlu0 %1536, %v171
        %v1538 = vpop.permute.xlu0 %1537
        %1539 = vset.pattern.permute.xlu0 6
        %1540 = vperm.xlu0 %1539, %v172
        %v1541 = vpop.permute.xlu0 %1540
        %1542 = vset.pattern.permute.xlu0 6
        %1543 = vperm.xlu0 %1542, %v173
        %v1544 = vpop.permute.xlu0 %1543
        %1545 = vset.pattern.permute.xlu0 6
        %1546 = vperm.xlu0 %1545, %v174
        %v1547 = vpop.permute.xlu0 %1546
        %1548 = vset.pattern.permute.xlu0 6
        %1549 = vperm.xlu0 %1548, %v175
        %v1550 = vpop.permute.xlu0 %1549
        %1551 = vset.pattern.permute.xlu0 6
        %1552 = vperm.xlu0 %1551, %v176
        %v1553 = vpop.permute.xlu0 %1552
        %1554 = vset.pattern.permute.xlu0 6
        %1555 = vperm.xlu0 %1554, %v177
        %v1556 = vpop.permute.xlu0 %1555
        %vm1557 = vcmp.eq.s32.totalorder %v179, %v1463
        %vm1558 = vcmp.eq.s32.totalorder %v180, %v1463
        %vm1559 = vcmp.eq.s32.totalorder %v179, %v1466
        %vm1560 = vcmp.eq.s32.totalorder %v180, %v1466
        %vm1561 = vcmp.eq.s32.totalorder %v179, %v1469
        %vm1562 = vcmp.eq.s32.totalorder %v180, %v1469
        %vm1563 = vcmp.eq.s32.totalorder %v179, %v1472
        %vm1564 = vcmp.eq.s32.totalorder %v180, %v1472
        %vm1565 = vcmp.eq.s32.totalorder %v179, %v1475
        %vm1566 = vcmp.eq.s32.totalorder %v180, %v1475
        %vm1567 = vcmp.eq.s32.totalorder %v179, %v1478
        %vm1568 = vcmp.eq.s32.totalorder %v180, %v1478
        %vm1569 = vcmp.eq.s32.totalorder %v179, %v1481
        %vm1570 = vcmp.eq.s32.totalorder %v180, %v1481
        %vm1571 = vcmp.eq.s32.totalorder %v179, %v1484
        %vm1572 = vcmp.eq.s32.totalorder %v180, %v1484
        %vm1573 = vcmp.eq.s32.totalorder %v179, %v1487
        %vm1574 = vcmp.eq.s32.totalorder %v180, %v1487
        %vm1575 = vcmp.eq.s32.totalorder %v179, %v1490
        %vm1576 = vcmp.eq.s32.totalorder %v180, %v1490
        %vm1577 = vcmp.eq.s32.totalorder %v179, %v1493
        %vm1578 = vcmp.eq.s32.totalorder %v180, %v1493
        %vm1579 = vcmp.eq.s32.totalorder %v179, %v1496
        %vm1580 = vcmp.eq.s32.totalorder %v180, %v1496
        %vm1581 = vcmp.eq.s32.totalorder %v179, %v1499
        %vm1582 = vcmp.eq.s32.totalorder %v180, %v1499
        %vm1583 = vcmp.eq.s32.totalorder %v179, %v1502
        %vm1584 = vcmp.eq.s32.totalorder %v180, %v1502
        %vm1585 = vcmp.eq.s32.totalorder %v179, %v1505
        %vm1586 = vcmp.eq.s32.totalorder %v180, %v1505
        %vm1587 = vcmp.eq.s32.totalorder %v179, %v1508
        %vm1588 = vcmp.eq.s32.totalorder %v180, %v1508
        %vm1589 = vcmp.eq.s32.totalorder %v179, %v1511
        %vm1590 = vcmp.eq.s32.totalorder %v180, %v1511
        %vm1591 = vcmp.eq.s32.totalorder %v179, %v1514
        %vm1592 = vcmp.eq.s32.totalorder %v180, %v1514
        %vm1593 = vcmp.eq.s32.totalorder %v179, %v1517
        %vm1594 = vcmp.eq.s32.totalorder %v180, %v1517
        %vm1595 = vcmp.eq.s32.totalorder %v179, %v1520
        %vm1596 = vcmp.eq.s32.totalorder %v180, %v1520
        %vm1597 = vcmp.eq.s32.totalorder %v179, %v1523
        %vm1598 = vcmp.eq.s32.totalorder %v180, %v1523
        %vm1599 = vcmp.eq.s32.totalorder %v179, %v1526
        %vm1600 = vcmp.eq.s32.totalorder %v180, %v1526
        %vm1601 = vcmp.eq.s32.totalorder %v179, %v1529
        %vm1602 = vcmp.eq.s32.totalorder %v180, %v1529
        %vm1603 = vcmp.eq.s32.totalorder %v179, %v1532
        %vm1604 = vcmp.eq.s32.totalorder %v180, %v1532
        %vm1605 = vcmp.eq.s32.totalorder %v179, %v1535
        %vm1606 = vcmp.eq.s32.totalorder %v180, %v1535
        %vm1607 = vcmp.eq.s32.totalorder %v179, %v1538
        %vm1608 = vcmp.eq.s32.totalorder %v180, %v1538
        %vm1609 = vcmp.eq.s32.totalorder %v179, %v1541
        %vm1610 = vcmp.eq.s32.totalorder %v180, %v1541
        %vm1611 = vcmp.eq.s32.totalorder %v179, %v1544
        %vm1612 = vcmp.eq.s32.totalorder %v180, %v1544
        %vm1613 = vcmp.eq.s32.totalorder %v179, %v1547
        %vm1614 = vcmp.eq.s32.totalorder %v180, %v1547
        %vm1615 = vcmp.eq.s32.totalorder %v179, %v1550
        %vm1616 = vcmp.eq.s32.totalorder %v180, %v1550
        %vm1617 = vcmp.eq.s32.totalorder %v179, %v1553
        %vm1618 = vcmp.eq.s32.totalorder %v180, %v1553
        %vm1619 = vcmp.eq.s32.totalorder %v179, %v1556
        %vm1620 = vcmp.eq.s32.totalorder %v180, %v1556
        %vm1621 = vmor %vm1397, %vm1557
        %vm1622 = vmor %vm1398, %vm1558
        %vm1623 = vmor %vm1399, %vm1559
        %vm1624 = vmor %vm1400, %vm1560
        %vm1625 = vmor %vm1401, %vm1561
        %vm1626 = vmor %vm1402, %vm1562
        %vm1627 = vmor %vm1403, %vm1563
        %vm1628 = vmor %vm1404, %vm1564
        %vm1629 = vmor %vm1405, %vm1565
        %vm1630 = vmor %vm1406, %vm1566
        %vm1631 = vmor %vm1407, %vm1567
        %vm1632 = vmor %vm1408, %vm1568
        %vm1633 = vmor %vm1409, %vm1569
        %vm1634 = vmor %vm1410, %vm1570
        %vm1635 = vmor %vm1411, %vm1571
        %vm1636 = vmor %vm1412, %vm1572
        %vm1637 = vmor %vm1413, %vm1573
        %vm1638 = vmor %vm1414, %vm1574
        %vm1639 = vmor %vm1415, %vm1575
        %vm1640 = vmor %vm1416, %vm1576
        %vm1641 = vmor %vm1417, %vm1577
        %vm1642 = vmor %vm1418, %vm1578
        %vm1643 = vmor %vm1419, %vm1579
        %vm1644 = vmor %vm1420, %vm1580
        %vm1645 = vmor %vm1421, %vm1581
        %vm1646 = vmor %vm1422, %vm1582
        %vm1647 = vmor %vm1423, %vm1583
        %vm1648 = vmor %vm1424, %vm1584
        %vm1649 = vmor %vm1425, %vm1585
        %vm1650 = vmor %vm1426, %vm1586
        %vm1651 = vmor %vm1427, %vm1587
        %vm1652 = vmor %vm1428, %vm1588
        %vm1653 = vmor %vm1429, %vm1589
        %vm1654 = vmor %vm1430, %vm1590
        %vm1655 = vmor %vm1431, %vm1591
        %vm1656 = vmor %vm1432, %vm1592
        %vm1657 = vmor %vm1433, %vm1593
        %vm1658 = vmor %vm1434, %vm1594
        %vm1659 = vmor %vm1435, %vm1595
        %vm1660 = vmor %vm1436, %vm1596
        %vm1661 = vmor %vm1437, %vm1597
        %vm1662 = vmor %vm1438, %vm1598
        %vm1663 = vmor %vm1439, %vm1599
        %vm1664 = vmor %vm1440, %vm1600
        %vm1665 = vmor %vm1441, %vm1601
        %vm1666 = vmor %vm1442, %vm1602
        %vm1667 = vmor %vm1443, %vm1603
        %vm1668 = vmor %vm1444, %vm1604
        %vm1669 = vmor %vm1445, %vm1605
        %vm1670 = vmor %vm1446, %vm1606
        %vm1671 = vmor %vm1447, %vm1607
        %vm1672 = vmor %vm1448, %vm1608
        %vm1673 = vmor %vm1449, %vm1609
        %vm1674 = vmor %vm1450, %vm1610
        %vm1675 = vmor %vm1451, %vm1611
        %vm1676 = vmor %vm1452, %vm1612
        %vm1677 = vmor %vm1453, %vm1613
        %vm1678 = vmor %vm1454, %vm1614
        %vm1679 = vmor %vm1455, %vm1615
        %vm1680 = vmor %vm1456, %vm1616
        %vm1681 = vmor %vm1457, %vm1617
        %vm1682 = vmor %vm1458, %vm1618
        %vm1683 = vmor %vm1459, %vm1619
        %vm1684 = vmor %vm1460, %vm1620
        %1685 = vset.pattern.permute.xlu0 7
        %1686 = vperm.xlu0 %1685, %v146
        %v1687 = vpop.permute.xlu0 %1686
        %1688 = vset.pattern.permute.xlu0 7
        %1689 = vperm.xlu0 %1688, %v147
        %v1690 = vpop.permute.xlu0 %1689
        %1691 = vset.pattern.permute.xlu0 7
        %1692 = vperm.xlu0 %1691, %v148
        %v1693 = vpop.permute.xlu0 %1692
        %1694 = vset.pattern.permute.xlu0 7
        %1695 = vperm.xlu0 %1694, %v149
        %v1696 = vpop.permute.xlu0 %1695
        %1697 = vset.pattern.permute.xlu0 7
        %1698 = vperm.xlu0 %1697, %v150
        %v1699 = vpop.permute.xlu0 %1698
        %1700 = vset.pattern.permute.xlu0 7
        %1701 = vperm.xlu0 %1700, %v151
        %v1702 = vpop.permute.xlu0 %1701
        %1703 = vset.pattern.permute.xlu0 7
        %1704 = vperm.xlu0 %1703, %v152
        %v1705 = vpop.permute.xlu0 %1704
        %1706 = vset.pattern.permute.xlu0 7
        %1707 = vperm.xlu0 %1706, %v153
        %v1708 = vpop.permute.xlu0 %1707
        %1709 = vset.pattern.permute.xlu0 7
        %1710 = vperm.xlu0 %1709, %v154
        %v1711 = vpop.permute.xlu0 %1710
        %1712 = vset.pattern.permute.xlu0 7
        %1713 = vperm.xlu0 %1712, %v155
        %v1714 = vpop.permute.xlu0 %1713
        %1715 = vset.pattern.permute.xlu0 7
        %1716 = vperm.xlu0 %1715, %v156
        %v1717 = vpop.permute.xlu0 %1716
        %1718 = vset.pattern.permute.xlu0 7
        %1719 = vperm.xlu0 %1718, %v157
        %v1720 = vpop.permute.xlu0 %1719
        %1721 = vset.pattern.permute.xlu0 7
        %1722 = vperm.xlu0 %1721, %v158
        %v1723 = vpop.permute.xlu0 %1722
        %1724 = vset.pattern.permute.xlu0 7
        %1725 = vperm.xlu0 %1724, %v159
        %v1726 = vpop.permute.xlu0 %1725
        %1727 = vset.pattern.permute.xlu0 7
        %1728 = vperm.xlu0 %1727, %v160
        %v1729 = vpop.permute.xlu0 %1728
        %1730 = vset.pattern.permute.xlu0 7
        %1731 = vperm.xlu0 %1730, %v161
        %v1732 = vpop.permute.xlu0 %1731
        %1733 = vset.pattern.permute.xlu0 7
        %1734 = vperm.xlu0 %1733, %v162
        %v1735 = vpop.permute.xlu0 %1734
        %1736 = vset.pattern.permute.xlu0 7
        %1737 = vperm.xlu0 %1736, %v163
        %v1738 = vpop.permute.xlu0 %1737
        %1739 = vset.pattern.permute.xlu0 7
        %1740 = vperm.xlu0 %1739, %v164
        %v1741 = vpop.permute.xlu0 %1740
        %1742 = vset.pattern.permute.xlu0 7
        %1743 = vperm.xlu0 %1742, %v165
        %v1744 = vpop.permute.xlu0 %1743
        %1745 = vset.pattern.permute.xlu0 7
        %1746 = vperm.xlu0 %1745, %v166
        %v1747 = vpop.permute.xlu0 %1746
        %1748 = vset.pattern.permute.xlu0 7
        %1749 = vperm.xlu0 %1748, %v167
        %v1750 = vpop.permute.xlu0 %1749
        %1751 = vset.pattern.permute.xlu0 7
        %1752 = vperm.xlu0 %1751, %v168
        %v1753 = vpop.permute.xlu0 %1752
        %1754 = vset.pattern.permute.xlu0 7
        %1755 = vperm.xlu0 %1754, %v169
        %v1756 = vpop.permute.xlu0 %1755
        %1757 = vset.pattern.permute.xlu0 7
        %1758 = vperm.xlu0 %1757, %v170
        %v1759 = vpop.permute.xlu0 %1758
        %1760 = vset.pattern.permute.xlu0 7
        %1761 = vperm.xlu0 %1760, %v171
        %v1762 = vpop.permute.xlu0 %1761
        %1763 = vset.pattern.permute.xlu0 7
        %1764 = vperm.xlu0 %1763, %v172
        %v1765 = vpop.permute.xlu0 %1764
        %1766 = vset.pattern.permute.xlu0 7
        %1767 = vperm.xlu0 %1766, %v173
        %v1768 = vpop.permute.xlu0 %1767
        %1769 = vset.pattern.permute.xlu0 7
        %1770 = vperm.xlu0 %1769, %v174
        %v1771 = vpop.permute.xlu0 %1770
        %1772 = vset.pattern.permute.xlu0 7
        %1773 = vperm.xlu0 %1772, %v175
        %v1774 = vpop.permute.xlu0 %1773
        %1775 = vset.pattern.permute.xlu0 7
        %1776 = vperm.xlu0 %1775, %v176
        %v1777 = vpop.permute.xlu0 %1776
        %1778 = vset.pattern.permute.xlu0 7
        %1779 = vperm.xlu0 %1778, %v177
        %v1780 = vpop.permute.xlu0 %1779
        %vm1781 = vcmp.eq.s32.totalorder %v179, %v1687
        %vm1782 = vcmp.eq.s32.totalorder %v180, %v1687
        %vm1783 = vcmp.eq.s32.totalorder %v179, %v1690
        %vm1784 = vcmp.eq.s32.totalorder %v180, %v1690
        %vm1785 = vcmp.eq.s32.totalorder %v179, %v1693
        %vm1786 = vcmp.eq.s32.totalorder %v180, %v1693
        %vm1787 = vcmp.eq.s32.totalorder %v179, %v1696
        %vm1788 = vcmp.eq.s32.totalorder %v180, %v1696
        %vm1789 = vcmp.eq.s32.totalorder %v179, %v1699
        %vm1790 = vcmp.eq.s32.totalorder %v180, %v1699
        %vm1791 = vcmp.eq.s32.totalorder %v179, %v1702
        %vm1792 = vcmp.eq.s32.totalorder %v180, %v1702
        %vm1793 = vcmp.eq.s32.totalorder %v179, %v1705
        %vm1794 = vcmp.eq.s32.totalorder %v180, %v1705
        %vm1795 = vcmp.eq.s32.totalorder %v179, %v1708
        %vm1796 = vcmp.eq.s32.totalorder %v180, %v1708
        %vm1797 = vcmp.eq.s32.totalorder %v179, %v1711
        %vm1798 = vcmp.eq.s32.totalorder %v180, %v1711
        %vm1799 = vcmp.eq.s32.totalorder %v179, %v1714
        %vm1800 = vcmp.eq.s32.totalorder %v180, %v1714
        %vm1801 = vcmp.eq.s32.totalorder %v179, %v1717
        %vm1802 = vcmp.eq.s32.totalorder %v180, %v1717
        %vm1803 = vcmp.eq.s32.totalorder %v179, %v1720
        %vm1804 = vcmp.eq.s32.totalorder %v180, %v1720
        %vm1805 = vcmp.eq.s32.totalorder %v179, %v1723
        %vm1806 = vcmp.eq.s32.totalorder %v180, %v1723
        %vm1807 = vcmp.eq.s32.totalorder %v179, %v1726
        %vm1808 = vcmp.eq.s32.totalorder %v180, %v1726
        %vm1809 = vcmp.eq.s32.totalorder %v179, %v1729
        %vm1810 = vcmp.eq.s32.totalorder %v180, %v1729
        %vm1811 = vcmp.eq.s32.totalorder %v179, %v1732
        %vm1812 = vcmp.eq.s32.totalorder %v180, %v1732
        %vm1813 = vcmp.eq.s32.totalorder %v179, %v1735
        %vm1814 = vcmp.eq.s32.totalorder %v180, %v1735
        %vm1815 = vcmp.eq.s32.totalorder %v179, %v1738
        %vm1816 = vcmp.eq.s32.totalorder %v180, %v1738
        %vm1817 = vcmp.eq.s32.totalorder %v179, %v1741
        %vm1818 = vcmp.eq.s32.totalorder %v180, %v1741
        %vm1819 = vcmp.eq.s32.totalorder %v179, %v1744
        %vm1820 = vcmp.eq.s32.totalorder %v180, %v1744
        %vm1821 = vcmp.eq.s32.totalorder %v179, %v1747
        %vm1822 = vcmp.eq.s32.totalorder %v180, %v1747
        %vm1823 = vcmp.eq.s32.totalorder %v179, %v1750
        %vm1824 = vcmp.eq.s32.totalorder %v180, %v1750
        %vm1825 = vcmp.eq.s32.totalorder %v179, %v1753
        %vm1826 = vcmp.eq.s32.totalorder %v180, %v1753
        %vm1827 = vcmp.eq.s32.totalorder %v179, %v1756
        %vm1828 = vcmp.eq.s32.totalorder %v180, %v1756
        %vm1829 = vcmp.eq.s32.totalorder %v179, %v1759
        %vm1830 = vcmp.eq.s32.totalorder %v180, %v1759
        %vm1831 = vcmp.eq.s32.totalorder %v179, %v1762
        %vm1832 = vcmp.eq.s32.totalorder %v180, %v1762
        %vm1833 = vcmp.eq.s32.totalorder %v179, %v1765
        %vm1834 = vcmp.eq.s32.totalorder %v180, %v1765
        %vm1835 = vcmp.eq.s32.totalorder %v179, %v1768
        %vm1836 = vcmp.eq.s32.totalorder %v180, %v1768
        %vm1837 = vcmp.eq.s32.totalorder %v179, %v1771
        %vm1838 = vcmp.eq.s32.totalorder %v180, %v1771
        %vm1839 = vcmp.eq.s32.totalorder %v179, %v1774
        %vm1840 = vcmp.eq.s32.totalorder %v180, %v1774
        %vm1841 = vcmp.eq.s32.totalorder %v179, %v1777
        %vm1842 = vcmp.eq.s32.totalorder %v180, %v1777
        %vm1843 = vcmp.eq.s32.totalorder %v179, %v1780
        %vm1844 = vcmp.eq.s32.totalorder %v180, %v1780
        %vm1845 = vmor %vm1621, %vm1781
        %vm1846 = vmor %vm1622, %vm1782
        %vm1847 = vmor %vm1623, %vm1783
        %vm1848 = vmor %vm1624, %vm1784
        %vm1849 = vmor %vm1625, %vm1785
        %vm1850 = vmor %vm1626, %vm1786
        %vm1851 = vmor %vm1627, %vm1787
        %vm1852 = vmor %vm1628, %vm1788
        %vm1853 = vmor %vm1629, %vm1789
        %vm1854 = vmor %vm1630, %vm1790
        %vm1855 = vmor %vm1631, %vm1791
        %vm1856 = vmor %vm1632, %vm1792
        %vm1857 = vmor %vm1633, %vm1793
        %vm1858 = vmor %vm1634, %vm1794
        %vm1859 = vmor %vm1635, %vm1795
        %vm1860 = vmor %vm1636, %vm1796
        %vm1861 = vmor %vm1637, %vm1797
        %vm1862 = vmor %vm1638, %vm1798
        %vm1863 = vmor %vm1639, %vm1799
        %vm1864 = vmor %vm1640, %vm1800
        %vm1865 = vmor %vm1641, %vm1801
        %vm1866 = vmor %vm1642, %vm1802
        %vm1867 = vmor %vm1643, %vm1803
        %vm1868 = vmor %vm1644, %vm1804
        %vm1869 = vmor %vm1645, %vm1805
        %vm1870 = vmor %vm1646, %vm1806
        %vm1871 = vmor %vm1647, %vm1807
        %vm1872 = vmor %vm1648, %vm1808
        %vm1873 = vmor %vm1649, %vm1809
        %vm1874 = vmor %vm1650, %vm1810
        %vm1875 = vmor %vm1651, %vm1811
        %vm1876 = vmor %vm1652, %vm1812
        %vm1877 = vmor %vm1653, %vm1813
        %vm1878 = vmor %vm1654, %vm1814
        %vm1879 = vmor %vm1655, %vm1815
        %vm1880 = vmor %vm1656, %vm1816
        %vm1881 = vmor %vm1657, %vm1817
        %vm1882 = vmor %vm1658, %vm1818
        %vm1883 = vmor %vm1659, %vm1819
        %vm1884 = vmor %vm1660, %vm1820
        %vm1885 = vmor %vm1661, %vm1821
        %vm1886 = vmor %vm1662, %vm1822
        %vm1887 = vmor %vm1663, %vm1823
        %vm1888 = vmor %vm1664, %vm1824
        %vm1889 = vmor %vm1665, %vm1825
        %vm1890 = vmor %vm1666, %vm1826
        %vm1891 = vmor %vm1667, %vm1827
        %vm1892 = vmor %vm1668, %vm1828
        %vm1893 = vmor %vm1669, %vm1829
        %vm1894 = vmor %vm1670, %vm1830
        %vm1895 = vmor %vm1671, %vm1831
        %vm1896 = vmor %vm1672, %vm1832
        %vm1897 = vmor %vm1673, %vm1833
        %vm1898 = vmor %vm1674, %vm1834
        %vm1899 = vmor %vm1675, %vm1835
        %vm1900 = vmor %vm1676, %vm1836
        %vm1901 = vmor %vm1677, %vm1837
        %vm1902 = vmor %vm1678, %vm1838
        %vm1903 = vmor %vm1679, %vm1839
        %vm1904 = vmor %vm1680, %vm1840
        %vm1905 = vmor %vm1681, %vm1841
        %vm1906 = vmor %vm1682, %vm1842
        %vm1907 = vmor %vm1683, %vm1843
        %vm1908 = vmor %vm1684, %vm1844
        %1909 = vset.pattern.permute.xlu0 8
        %1910 = vperm.xlu0 %1909, %v146
        %v1911 = vpop.permute.xlu0 %1910
        %1912 = vset.pattern.permute.xlu0 8
        %1913 = vperm.xlu0 %1912, %v147
        %v1914 = vpop.permute.xlu0 %1913
        %1915 = vset.pattern.permute.xlu0 8
        %1916 = vperm.xlu0 %1915, %v148
        %v1917 = vpop.permute.xlu0 %1916
        %1918 = vset.pattern.permute.xlu0 8
        %1919 = vperm.xlu0 %1918, %v149
        %v1920 = vpop.permute.xlu0 %1919
        %1921 = vset.pattern.permute.xlu0 8
        %1922 = vperm.xlu0 %1921, %v150
        %v1923 = vpop.permute.xlu0 %1922
        %1924 = vset.pattern.permute.xlu0 8
        %1925 = vperm.xlu0 %1924, %v151
        %v1926 = vpop.permute.xlu0 %1925
        %1927 = vset.pattern.permute.xlu0 8
        %1928 = vperm.xlu0 %1927, %v152
        %v1929 = vpop.permute.xlu0 %1928
        %1930 = vset.pattern.permute.xlu0 8
        %1931 = vperm.xlu0 %1930, %v153
        %v1932 = vpop.permute.xlu0 %1931
        %1933 = vset.pattern.permute.xlu0 8
        %1934 = vperm.xlu0 %1933, %v154
        %v1935 = vpop.permute.xlu0 %1934
        %1936 = vset.pattern.permute.xlu0 8
        %1937 = vperm.xlu0 %1936, %v155
        %v1938 = vpop.permute.xlu0 %1937
        %1939 = vset.pattern.permute.xlu0 8
        %1940 = vperm.xlu0 %1939, %v156
        %v1941 = vpop.permute.xlu0 %1940
        %1942 = vset.pattern.permute.xlu0 8
        %1943 = vperm.xlu0 %1942, %v157
        %v1944 = vpop.permute.xlu0 %1943
        %1945 = vset.pattern.permute.xlu0 8
        %1946 = vperm.xlu0 %1945, %v158
        %v1947 = vpop.permute.xlu0 %1946
        %1948 = vset.pattern.permute.xlu0 8
        %1949 = vperm.xlu0 %1948, %v159
        %v1950 = vpop.permute.xlu0 %1949
        %1951 = vset.pattern.permute.xlu0 8
        %1952 = vperm.xlu0 %1951, %v160
        %v1953 = vpop.permute.xlu0 %1952
        %1954 = vset.pattern.permute.xlu0 8
        %1955 = vperm.xlu0 %1954, %v161
        %v1956 = vpop.permute.xlu0 %1955
        %1957 = vset.pattern.permute.xlu0 8
        %1958 = vperm.xlu0 %1957, %v162
        %v1959 = vpop.permute.xlu0 %1958
        %1960 = vset.pattern.permute.xlu0 8
        %1961 = vperm.xlu0 %1960, %v163
        %v1962 = vpop.permute.xlu0 %1961
        %1963 = vset.pattern.permute.xlu0 8
        %1964 = vperm.xlu0 %1963, %v164
        %v1965 = vpop.permute.xlu0 %1964
        %1966 = vset.pattern.permute.xlu0 8
        %1967 = vperm.xlu0 %1966, %v165
        %v1968 = vpop.permute.xlu0 %1967
        %1969 = vset.pattern.permute.xlu0 8
        %1970 = vperm.xlu0 %1969, %v166
        %v1971 = vpop.permute.xlu0 %1970
        %1972 = vset.pattern.permute.xlu0 8
        %1973 = vperm.xlu0 %1972, %v167
        %v1974 = vpop.permute.xlu0 %1973
        %1975 = vset.pattern.permute.xlu0 8
        %1976 = vperm.xlu0 %1975, %v168
        %v1977 = vpop.permute.xlu0 %1976
        %1978 = vset.pattern.permute.xlu0 8
        %1979 = vperm.xlu0 %1978, %v169
        %v1980 = vpop.permute.xlu0 %1979
        %1981 = vset.pattern.permute.xlu0 8
        %1982 = vperm.xlu0 %1981, %v170
        %v1983 = vpop.permute.xlu0 %1982
        %1984 = vset.pattern.permute.xlu0 8
        %1985 = vperm.xlu0 %1984, %v171
        %v1986 = vpop.permute.xlu0 %1985
        %1987 = vset.pattern.permute.xlu0 8
        %1988 = vperm.xlu0 %1987, %v172
        %v1989 = vpop.permute.xlu0 %1988
        %1990 = vset.pattern.permute.xlu0 8
        %1991 = vperm.xlu0 %1990, %v173
        %v1992 = vpop.permute.xlu0 %1991
        %1993 = vset.pattern.permute.xlu0 8
        %1994 = vperm.xlu0 %1993, %v174
        %v1995 = vpop.permute.xlu0 %1994
        %1996 = vset.pattern.permute.xlu0 8
        %1997 = vperm.xlu0 %1996, %v175
        %v1998 = vpop.permute.xlu0 %1997
        %1999 = vset.pattern.permute.xlu0 8
        %2000 = vperm.xlu0 %1999, %v176
        %v2001 = vpop.permute.xlu0 %2000
        %2002 = vset.pattern.permute.xlu0 8
        %2003 = vperm.xlu0 %2002, %v177
        %v2004 = vpop.permute.xlu0 %2003
        %vm2005 = vcmp.eq.s32.totalorder %v179, %v1911
        %vm2006 = vcmp.eq.s32.totalorder %v180, %v1911
        %vm2007 = vcmp.eq.s32.totalorder %v179, %v1914
        %vm2008 = vcmp.eq.s32.totalorder %v180, %v1914
        %vm2009 = vcmp.eq.s32.totalorder %v179, %v1917
        %vm2010 = vcmp.eq.s32.totalorder %v180, %v1917
        %vm2011 = vcmp.eq.s32.totalorder %v179, %v1920
        %vm2012 = vcmp.eq.s32.totalorder %v180, %v1920
        %vm2013 = vcmp.eq.s32.totalorder %v179, %v1923
        %vm2014 = vcmp.eq.s32.totalorder %v180, %v1923
        %vm2015 = vcmp.eq.s32.totalorder %v179, %v1926
        %vm2016 = vcmp.eq.s32.totalorder %v180, %v1926
        %vm2017 = vcmp.eq.s32.totalorder %v179, %v1929
        %vm2018 = vcmp.eq.s32.totalorder %v180, %v1929
        %vm2019 = vcmp.eq.s32.totalorder %v179, %v1932
        %vm2020 = vcmp.eq.s32.totalorder %v180, %v1932
        %vm2021 = vcmp.eq.s32.totalorder %v179, %v1935
        %vm2022 = vcmp.eq.s32.totalorder %v180, %v1935
        %vm2023 = vcmp.eq.s32.totalorder %v179, %v1938
        %vm2024 = vcmp.eq.s32.totalorder %v180, %v1938
        %vm2025 = vcmp.eq.s32.totalorder %v179, %v1941
        %vm2026 = vcmp.eq.s32.totalorder %v180, %v1941
        %vm2027 = vcmp.eq.s32.totalorder %v179, %v1944
        %vm2028 = vcmp.eq.s32.totalorder %v180, %v1944
        %vm2029 = vcmp.eq.s32.totalorder %v179, %v1947
        %vm2030 = vcmp.eq.s32.totalorder %v180, %v1947
        %vm2031 = vcmp.eq.s32.totalorder %v179, %v1950
        %vm2032 = vcmp.eq.s32.totalorder %v180, %v1950
        %vm2033 = vcmp.eq.s32.totalorder %v179, %v1953
        %vm2034 = vcmp.eq.s32.totalorder %v180, %v1953
        %vm2035 = vcmp.eq.s32.totalorder %v179, %v1956
        %vm2036 = vcmp.eq.s32.totalorder %v180, %v1956
        %vm2037 = vcmp.eq.s32.totalorder %v179, %v1959
        %vm2038 = vcmp.eq.s32.totalorder %v180, %v1959
        %vm2039 = vcmp.eq.s32.totalorder %v179, %v1962
        %vm2040 = vcmp.eq.s32.totalorder %v180, %v1962
        %vm2041 = vcmp.eq.s32.totalorder %v179, %v1965
        %vm2042 = vcmp.eq.s32.totalorder %v180, %v1965
        %vm2043 = vcmp.eq.s32.totalorder %v179, %v1968
        %vm2044 = vcmp.eq.s32.totalorder %v180, %v1968
        %vm2045 = vcmp.eq.s32.totalorder %v179, %v1971
        %vm2046 = vcmp.eq.s32.totalorder %v180, %v1971
        %vm2047 = vcmp.eq.s32.totalorder %v179, %v1974
        %vm2048 = vcmp.eq.s32.totalorder %v180, %v1974
        %vm2049 = vcmp.eq.s32.totalorder %v179, %v1977
        %vm2050 = vcmp.eq.s32.totalorder %v180, %v1977
        %vm2051 = vcmp.eq.s32.totalorder %v179, %v1980
        %vm2052 = vcmp.eq.s32.totalorder %v180, %v1980
        %vm2053 = vcmp.eq.s32.totalorder %v179, %v1983
        %vm2054 = vcmp.eq.s32.totalorder %v180, %v1983
        %vm2055 = vcmp.eq.s32.totalorder %v179, %v1986
        %vm2056 = vcmp.eq.s32.totalorder %v180, %v1986
        %vm2057 = vcmp.eq.s32.totalorder %v179, %v1989
        %vm2058 = vcmp.eq.s32.totalorder %v180, %v1989
        %vm2059 = vcmp.eq.s32.totalorder %v179, %v1992
        %vm2060 = vcmp.eq.s32.totalorder %v180, %v1992
        %vm2061 = vcmp.eq.s32.totalorder %v179, %v1995
        %vm2062 = vcmp.eq.s32.totalorder %v180, %v1995
        %vm2063 = vcmp.eq.s32.totalorder %v179, %v1998
        %vm2064 = vcmp.eq.s32.totalorder %v180, %v1998
        %vm2065 = vcmp.eq.s32.totalorder %v179, %v2001
        %vm2066 = vcmp.eq.s32.totalorder %v180, %v2001
        %vm2067 = vcmp.eq.s32.totalorder %v179, %v2004
        %vm2068 = vcmp.eq.s32.totalorder %v180, %v2004
        %vm2069 = vmor %vm1845, %vm2005
        %vm2070 = vmor %vm1846, %vm2006
        %vm2071 = vmor %vm1847, %vm2007
        %vm2072 = vmor %vm1848, %vm2008
        %vm2073 = vmor %vm1849, %vm2009
        %vm2074 = vmor %vm1850, %vm2010
        %vm2075 = vmor %vm1851, %vm2011
        %vm2076 = vmor %vm1852, %vm2012
        %vm2077 = vmor %vm1853, %vm2013
        %vm2078 = vmor %vm1854, %vm2014
        %vm2079 = vmor %vm1855, %vm2015
        %vm2080 = vmor %vm1856, %vm2016
        %vm2081 = vmor %vm1857, %vm2017
        %vm2082 = vmor %vm1858, %vm2018
        %vm2083 = vmor %vm1859, %vm2019
        %vm2084 = vmor %vm1860, %vm2020
        %vm2085 = vmor %vm1861, %vm2021
        %vm2086 = vmor %vm1862, %vm2022
        %vm2087 = vmor %vm1863, %vm2023
        %vm2088 = vmor %vm1864, %vm2024
        %vm2089 = vmor %vm1865, %vm2025
        %vm2090 = vmor %vm1866, %vm2026
        %vm2091 = vmor %vm1867, %vm2027
        %vm2092 = vmor %vm1868, %vm2028
        %vm2093 = vmor %vm1869, %vm2029
        %vm2094 = vmor %vm1870, %vm2030
        %vm2095 = vmor %vm1871, %vm2031
        %vm2096 = vmor %vm1872, %vm2032
        %vm2097 = vmor %vm1873, %vm2033
        %vm2098 = vmor %vm1874, %vm2034
        %vm2099 = vmor %vm1875, %vm2035
        %vm2100 = vmor %vm1876, %vm2036
        %vm2101 = vmor %vm1877, %vm2037
        %vm2102 = vmor %vm1878, %vm2038
        %vm2103 = vmor %vm1879, %vm2039
        %vm2104 = vmor %vm1880, %vm2040
        %vm2105 = vmor %vm1881, %vm2041
        %vm2106 = vmor %vm1882, %vm2042
        %vm2107 = vmor %vm1883, %vm2043
        %vm2108 = vmor %vm1884, %vm2044
        %vm2109 = vmor %vm1885, %vm2045
        %vm2110 = vmor %vm1886, %vm2046
        %vm2111 = vmor %vm1887, %vm2047
        %vm2112 = vmor %vm1888, %vm2048
        %vm2113 = vmor %vm1889, %vm2049
        %vm2114 = vmor %vm1890, %vm2050
        %vm2115 = vmor %vm1891, %vm2051
        %vm2116 = vmor %vm1892, %vm2052
        %vm2117 = vmor %vm1893, %vm2053
        %vm2118 = vmor %vm1894, %vm2054
        %vm2119 = vmor %vm1895, %vm2055
        %vm2120 = vmor %vm1896, %vm2056
        %vm2121 = vmor %vm1897, %vm2057
        %vm2122 = vmor %vm1898, %vm2058
        %vm2123 = vmor %vm1899, %vm2059
        %vm2124 = vmor %vm1900, %vm2060
        %vm2125 = vmor %vm1901, %vm2061
        %vm2126 = vmor %vm1902, %vm2062
        %vm2127 = vmor %vm1903, %vm2063
        %vm2128 = vmor %vm1904, %vm2064
        %vm2129 = vmor %vm1905, %vm2065
        %vm2130 = vmor %vm1906, %vm2066
        %vm2131 = vmor %vm1907, %vm2067
        %vm2132 = vmor %vm1908, %vm2068
        %v2133 = vsel %vm2069, 1, 0
        %v2134 = vsel %vm2070, 1, 0
        %v2135 = vsel %vm2071, 1, 0
        %v2136 = vsel %vm2072, 1, 0
        %v2137 = vsel %vm2073, 1, 0
        %v2138 = vsel %vm2074, 1, 0
        %v2139 = vsel %vm2075, 1, 0
        %v2140 = vsel %vm2076, 1, 0
        %v2141 = vsel %vm2077, 1, 0
        %v2142 = vsel %vm2078, 1, 0
        %v2143 = vsel %vm2079, 1, 0
        %v2144 = vsel %vm2080, 1, 0
        %v2145 = vsel %vm2081, 1, 0
        %v2146 = vsel %vm2082, 1, 0
        %v2147 = vsel %vm2083, 1, 0
        %v2148 = vsel %vm2084, 1, 0
        %v2149 = vsel %vm2085, 1, 0
        %v2150 = vsel %vm2086, 1, 0
        %v2151 = vsel %vm2087, 1, 0
        %v2152 = vsel %vm2088, 1, 0
        %v2153 = vsel %vm2089, 1, 0
        %v2154 = vsel %vm2090, 1, 0
        %v2155 = vsel %vm2091, 1, 0
        %v2156 = vsel %vm2092, 1, 0
        %v2157 = vsel %vm2093, 1, 0
        %v2158 = vsel %vm2094, 1, 0
        %v2159 = vsel %vm2095, 1, 0
        %v2160 = vsel %vm2096, 1, 0
        %v2161 = vsel %vm2097, 1, 0
        %v2162 = vsel %vm2098, 1, 0
        %v2163 = vsel %vm2099, 1, 0
        %v2164 = vsel %vm2100, 1, 0
        %v2165 = vsel %vm2101, 1, 0
        %v2166 = vsel %vm2102, 1, 0
        %v2167 = vsel %vm2103, 1, 0
        %v2168 = vsel %vm2104, 1, 0
        %v2169 = vsel %vm2105, 1, 0
        %v2170 = vsel %vm2106, 1, 0
        %v2171 = vsel %vm2107, 1, 0
        %v2172 = vsel %vm2108, 1, 0
        %v2173 = vsel %vm2109, 1, 0
        %v2174 = vsel %vm2110, 1, 0
        %v2175 = vsel %vm2111, 1, 0
        %v2176 = vsel %vm2112, 1, 0
        %v2177 = vsel %vm2113, 1, 0
        %v2178 = vsel %vm2114, 1, 0
        %v2179 = vsel %vm2115, 1, 0
        %v2180 = vsel %vm2116, 1, 0
        %v2181 = vsel %vm2117, 1, 0
        %v2182 = vsel %vm2118, 1, 0
        %v2183 = vsel %vm2119, 1, 0
        %v2184 = vsel %vm2120, 1, 0
        %v2185 = vsel %vm2121, 1, 0
        %v2186 = vsel %vm2122, 1, 0
        %v2187 = vsel %vm2123, 1, 0
        %v2188 = vsel %vm2124, 1, 0
        %v2189 = vsel %vm2125, 1, 0
        %v2190 = vsel %vm2126, 1, 0
        %v2191 = vsel %vm2127, 1, 0
        %v2192 = vsel %vm2128, 1, 0
        %v2193 = vsel %vm2129, 1, 0
        %v2194 = vsel %vm2130, 1, 0
        %v2195 = vsel %vm2131, 1, 0
        %v2196 = vsel %vm2132, 1, 0
        %v2197 = vcvt.s32.f32 %v2133
        %v2198 = vcvt.s32.f32 %v2134
        %v2199 = vcvt.s32.f32 %v2135
        %v2200 = vcvt.s32.f32 %v2136
        %v2201 = vcvt.s32.f32 %v2137
        %v2202 = vcvt.s32.f32 %v2138
        %v2203 = vcvt.s32.f32 %v2139
        %v2204 = vcvt.s32.f32 %v2140
        %v2205 = vcvt.s32.f32 %v2141
        %v2206 = vcvt.s32.f32 %v2142
        %v2207 = vcvt.s32.f32 %v2143
        %v2208 = vcvt.s32.f32 %v2144
        %v2209 = vcvt.s32.f32 %v2145
        %v2210 = vcvt.s32.f32 %v2146
        %v2211 = vcvt.s32.f32 %v2147
        %v2212 = vcvt.s32.f32 %v2148
        %v2213 = vcvt.s32.f32 %v2149
        %v2214 = vcvt.s32.f32 %v2150
        %v2215 = vcvt.s32.f32 %v2151
        %v2216 = vcvt.s32.f32 %v2152
        %v2217 = vcvt.s32.f32 %v2153
        %v2218 = vcvt.s32.f32 %v2154
        %v2219 = vcvt.s32.f32 %v2155
        %v2220 = vcvt.s32.f32 %v2156
        %v2221 = vcvt.s32.f32 %v2157
        %v2222 = vcvt.s32.f32 %v2158
        %v2223 = vcvt.s32.f32 %v2159
        %v2224 = vcvt.s32.f32 %v2160
        %v2225 = vcvt.s32.f32 %v2161
        %v2226 = vcvt.s32.f32 %v2162
        %v2227 = vcvt.s32.f32 %v2163
        %v2228 = vcvt.s32.f32 %v2164
        %v2229 = vcvt.s32.f32 %v2165
        %v2230 = vcvt.s32.f32 %v2166
        %v2231 = vcvt.s32.f32 %v2167
        %v2232 = vcvt.s32.f32 %v2168
        %v2233 = vcvt.s32.f32 %v2169
        %v2234 = vcvt.s32.f32 %v2170
        %v2235 = vcvt.s32.f32 %v2171
        %v2236 = vcvt.s32.f32 %v2172
        %v2237 = vcvt.s32.f32 %v2173
        %v2238 = vcvt.s32.f32 %v2174
        %v2239 = vcvt.s32.f32 %v2175
        %v2240 = vcvt.s32.f32 %v2176
        %v2241 = vcvt.s32.f32 %v2177
        %v2242 = vcvt.s32.f32 %v2178
        %v2243 = vcvt.s32.f32 %v2179
        %v2244 = vcvt.s32.f32 %v2180
        %v2245 = vcvt.s32.f32 %v2181
        %v2246 = vcvt.s32.f32 %v2182
        %v2247 = vcvt.s32.f32 %v2183
        %v2248 = vcvt.s32.f32 %v2184
        %v2249 = vcvt.s32.f32 %v2185
        %v2250 = vcvt.s32.f32 %v2186
        %v2251 = vcvt.s32.f32 %v2187
        %v2252 = vcvt.s32.f32 %v2188
        %v2253 = vcvt.s32.f32 %v2189
        %v2254 = vcvt.s32.f32 %v2190
        %v2255 = vcvt.s32.f32 %v2191
        %v2256 = vcvt.s32.f32 %v2192
        %v2257 = vcvt.s32.f32 %v2193
        %v2258 = vcvt.s32.f32 %v2194
        %v2259 = vcvt.s32.f32 %v2195
        %v2260 = vcvt.s32.f32 %v2196
        %v2261 = vpack.c.bf16 %v2199, %v2197
        %v2262 = vpack.c.bf16 %v2200, %v2198
        %v2263 = vpack.c.bf16 %v2203, %v2201
        %v2264 = vpack.c.bf16 %v2204, %v2202
        %v2265 = vpack.c.bf16 %v2207, %v2205
        %v2266 = vpack.c.bf16 %v2208, %v2206
        %v2267 = vpack.c.bf16 %v2211, %v2209
        %v2268 = vpack.c.bf16 %v2212, %v2210
        %v2269 = vpack.c.bf16 %v2215, %v2213
        %v2270 = vpack.c.bf16 %v2216, %v2214
        %v2271 = vpack.c.bf16 %v2219, %v2217
        %v2272 = vpack.c.bf16 %v2220, %v2218
        %v2273 = vpack.c.bf16 %v2223, %v2221
        %v2274 = vpack.c.bf16 %v2224, %v2222
        %v2275 = vpack.c.bf16 %v2227, %v2225
        %v2276 = vpack.c.bf16 %v2228, %v2226
        %v2277 = vpack.c.bf16 %v2231, %v2229
        %v2278 = vpack.c.bf16 %v2232, %v2230
        %v2279 = vpack.c.bf16 %v2235, %v2233
        %v2280 = vpack.c.bf16 %v2236, %v2234
        %v2281 = vpack.c.bf16 %v2239, %v2237
        %v2282 = vpack.c.bf16 %v2240, %v2238
        %v2283 = vpack.c.bf16 %v2243, %v2241
        %v2284 = vpack.c.bf16 %v2244, %v2242
        %v2285 = vpack.c.bf16 %v2247, %v2245
        %v2286 = vpack.c.bf16 %v2248, %v2246
        %v2287 = vpack.c.bf16 %v2251, %v2249
        %v2288 = vpack.c.bf16 %v2252, %v2250
        %v2289 = vpack.c.bf16 %v2255, %v2253
        %v2290 = vpack.c.bf16 %v2256, %v2254
        %v2291 = vpack.c.bf16 %v2259, %v2257
        %v2292 = vpack.c.bf16 %v2260, %v2258
        %v2293 = vld [vmem:[%s1] sm:$0xf]
        %v2294 = vld [vmem:[%s1 + $0x4] sm:$0xf]
        %v2295 = vld [vmem:[%s1 + $0x8] sm:$0xf]
        %v2296 = vld [vmem:[%s1 + $0xc] sm:$0xf]
        %v2297 = vld [vmem:[%s1 + $0x10] sm:$0xf]
        %v2298 = vld [vmem:[%s1 + $0x14] sm:$0xf]
        %v2299 = vld [vmem:[%s1 + $0x18] sm:$0xf]
        %v2300 = vld [vmem:[%s1 + $0x1c] sm:$0xf]
        %v2301 = vld [vmem:[%s1 + $0x20] sm:$0xf]
        %v2302 = vld [vmem:[%s1 + $0x24] sm:$0xf]
        %v2303 = vld [vmem:[%s1 + $0x28] sm:$0xf]
        %v2304 = vld [vmem:[%s1 + $0x2c] sm:$0xf]
        %v2305 = vld [vmem:[%s1 + $0x30] sm:$0xf]
        %v2306 = vld [vmem:[%s1 + $0x34] sm:$0xf]
        %v2307 = vld [vmem:[%s1 + $0x38] sm:$0xf]
        %v2308 = vld [vmem:[%s1 + $0x3c] sm:$0xf]
        %v2309 = vld [vmem:[%s1 + $0x40] sm:$0xf]
        %v2310 = vld [vmem:[%s1 + $0x44] sm:$0xf]
        %v2311 = vld [vmem:[%s1 + $0x48] sm:$0xf]
        %v2312 = vld [vmem:[%s1 + $0x4c] sm:$0xf]
        %v2313 = vld [vmem:[%s1 + $0x50] sm:$0xf]
        %v2314 = vld [vmem:[%s1 + $0x54] sm:$0xf]
        %v2315 = vld [vmem:[%s1 + $0x58] sm:$0xf]
        %v2316 = vld [vmem:[%s1 + $0x5c] sm:$0xf]
        %v2317 = vld [vmem:[%s1 + $0x60] sm:$0xf]
        %v2318 = vld [vmem:[%s1 + $0x64] sm:$0xf]
        %v2319 = vld [vmem:[%s1 + $0x68] sm:$0xf]
        %v2320 = vld [vmem:[%s1 + $0x6c] sm:$0xf]
        %v2321 = vld [vmem:[%s1 + $0x70] sm:$0xf]
        %v2322 = vld [vmem:[%s1 + $0x74] sm:$0xf]
        %v2323 = vld [vmem:[%s1 + $0x78] sm:$0xf]
        %v2324 = vld [vmem:[%s1 + $0x7c] sm:$0xf]
        %v2357 = vunpack.c.l.b16 %v2293
        %v2358 = vunpack.c.l.b16 %v2294
        %v2359 = vunpack.c.l.b16 %v2295
        %v2360 = vunpack.c.l.b16 %v2296
        %v2361 = vunpack.c.l.b16 %v2297
        %v2362 = vunpack.c.l.b16 %v2298
        %v2363 = vunpack.c.l.b16 %v2299
        %v2364 = vunpack.c.l.b16 %v2300
        %v2365 = vunpack.c.l.b16 %v2301
        %v2366 = vunpack.c.l.b16 %v2302
        %v2367 = vunpack.c.l.b16 %v2303
        %v2368 = vunpack.c.l.b16 %v2304
        %v2369 = vunpack.c.l.b16 %v2305
        %v2370 = vunpack.c.l.b16 %v2306
        %v2371 = vunpack.c.l.b16 %v2307
        %v2372 = vunpack.c.l.b16 %v2308
        %v2373 = vunpack.c.l.b16 %v2309
        %v2374 = vunpack.c.l.b16 %v2310
        %v2375 = vunpack.c.l.b16 %v2311
        %v2376 = vunpack.c.l.b16 %v2312
        %v2377 = vunpack.c.l.b16 %v2313
        %v2378 = vunpack.c.l.b16 %v2314
        %v2379 = vunpack.c.l.b16 %v2315
        %v2380 = vunpack.c.l.b16 %v2316
        %v2381 = vunpack.c.l.b16 %v2317
        %v2382 = vunpack.c.l.b16 %v2318
        %v2383 = vunpack.c.l.b16 %v2319
        %v2384 = vunpack.c.l.b16 %v2320
        %v2385 = vunpack.c.l.b16 %v2321
        %v2386 = vunpack.c.l.b16 %v2322
        %v2387 = vunpack.c.l.b16 %v2323
        %v2388 = vunpack.c.l.b16 %v2324
        %v2389 = vpack.c.b16 %v2358, %v2357
        %v2390 = vpack.c.b16 %v2360, %v2359
        %v2391 = vpack.c.b16 %v2362, %v2361
        %v2392 = vpack.c.b16 %v2364, %v2363
        %v2393 = vpack.c.b16 %v2366, %v2365
        %v2394 = vpack.c.b16 %v2368, %v2367
        %v2395 = vpack.c.b16 %v2370, %v2369
        %v2396 = vpack.c.b16 %v2372, %v2371
        %v2397 = vpack.c.b16 %v2374, %v2373
        %v2398 = vpack.c.b16 %v2376, %v2375
        %v2399 = vpack.c.b16 %v2378, %v2377
        %v2400 = vpack.c.b16 %v2380, %v2379
        %v2401 = vpack.c.b16 %v2382, %v2381
        %v2402 = vpack.c.b16 %v2384, %v2383
        %v2403 = vpack.c.b16 %v2386, %v2385
        %v2404 = vpack.c.b16 %v2388, %v2387
        %2421 = vmatprep.subr.bf16.mxu0 0
        %2422 = vmatpush1.bf16.msra.mxu0 %v2396
        %2423 = vmatprep.subr.bf16.mxu0 0
        %2424 = vmatpush1.bf16.msra.mxu0 %v2395
        %2425 = vmatprep.subr.bf16.mxu0 0
        %2426 = vmatpush1.bf16.msra.mxu0 %v2394
        %2427 = vmatprep.subr.bf16.mxu0 0
        %2428 = vmatpush1.bf16.msra.mxu0 %v2393
        %2429 = vmatprep.subr.bf16.mxu0 0
        %2430 = vmatpush1.bf16.msra.mxu0 %v2392
        %2431 = vmatprep.subr.bf16.mxu0 0
        %2432 = vmatpush1.bf16.msra.mxu0 %v2391
        %2433 = vmatprep.subr.bf16.mxu0 0
        %2434 = vmatpush1.bf16.msra.mxu0 %v2390
        %2435 = vmatprep.subr.bf16.mxu0 0
        %2436 = vmatpush1.bf16.msra.mxu0 %v2389
        %2437 = vmatprep.subr.bf16.mxu0 0
        %2438 = vmatpush2.bf16.msra.mxu0 %v2404
        %2439 = vmatprep.subr.bf16.mxu0 0
        %2440 = vmatpush2.bf16.msra.mxu0 %v2403
        %2441 = vmatprep.subr.bf16.mxu0 0
        %2442 = vmatpush2.bf16.msra.mxu0 %v2402
        %2443 = vmatprep.subr.bf16.mxu0 0
        %2444 = vmatpush2.bf16.msra.mxu0 %v2401
        %2445 = vmatprep.subr.bf16.mxu0 0
        %2446 = vmatpush2.bf16.msra.mxu0 %v2400
        %2447 = vmatprep.subr.bf16.mxu0 0
        %2448 = vmatpush2.bf16.msra.mxu0 %v2399
        %2449 = vmatprep.subr.bf16.mxu0 0
        %2450 = vmatpush2.bf16.msra.mxu0 %v2398
        %2451 = vmatprep.subr.bf16.mxu0 0
        %2452 = vmatpush2.bf16.msra.mxu0 %v2397
        %2453 = vmatprep.mubr.bf16.mxu0 %v2262
        %2454 = vmatmul.mubr.bf16.gmra.mxu0 %v2261
        %v2455 = vpop.f32.mrf.mxu0
        %v2456 = vadd.f32 0.0, %v2455
        %v2457 = vpop.f32.mrf.mxu0
        %v2458 = vpop.f32.mrf.mxu0
        %v2459 = vadd.f32 0.0, %v2458
        %v2460 = vpop.f32.mrf.mxu0
        %2461 = vmatprep.mubr.bf16.mxu0 %v2264
        %2462 = vmatmul.mubr.bf16.gmra.mxu0 %v2263
        %v2463 = vpop.f32.mrf.mxu0
        %v2464 = vadd.f32 0.0, %v2463
        %v2465 = vpop.f32.mrf.mxu0
        %v2466 = vpop.f32.mrf.mxu0
        %v2467 = vadd.f32 0.0, %v2466
        %v2468 = vpop.f32.mrf.mxu0
        %2469 = vmatprep.mubr.bf16.mxu0 %v2266
        %2470 = vmatmul.mubr.bf16.gmra.mxu0 %v2265
        %v2471 = vpop.f32.mrf.mxu0
        %v2472 = vadd.f32 0.0, %v2471
        %v2473 = vpop.f32.mrf.mxu0
        %v2474 = vpop.f32.mrf.mxu0
        %v2475 = vadd.f32 0.0, %v2474
        %v2476 = vpop.f32.mrf.mxu0
        %2477 = vmatprep.mubr.bf16.mxu0 %v2268
        %2478 = vmatmul.mubr.bf16.gmra.mxu0 %v2267
        %v2479 = vpop.f32.mrf.mxu0
        %v2480 = vadd.f32 0.0, %v2479
        %v2481 = vpop.f32.mrf.mxu0
        %v2482 = vpop.f32.mrf.mxu0
        %v2483 = vadd.f32 0.0, %v2482
        %v2484 = vpop.f32.mrf.mxu0
        %2485 = vmatprep.mubr.bf16.mxu0 %v2270
        %2486 = vmatmul.mubr.bf16.gmra.mxu0 %v2269
        %v2487 = vpop.f32.mrf.mxu0
        %v2488 = vadd.f32 0.0, %v2487
        %v2489 = vpop.f32.mrf.mxu0
        %v2490 = vpop.f32.mrf.mxu0
        %v2491 = vadd.f32 0.0, %v2490
        %v2492 = vpop.f32.mrf.mxu0
        %2493 = vmatprep.mubr.bf16.mxu0 %v2272
        %2494 = vmatmul.mubr.bf16.gmra.mxu0 %v2271
        %v2495 = vpop.f32.mrf.mxu0
        %v2496 = vadd.f32 0.0, %v2495
        %v2497 = vpop.f32.mrf.mxu0
        %v2498 = vpop.f32.mrf.mxu0
        %v2499 = vadd.f32 0.0, %v2498
        %v2500 = vpop.f32.mrf.mxu0
        %2501 = vmatprep.mubr.bf16.mxu0 %v2274
        %2502 = vmatmul.mubr.bf16.gmra.mxu0 %v2273
        %v2503 = vpop.f32.mrf.mxu0
        %v2504 = vadd.f32 0.0, %v2503
        %v2505 = vpop.f32.mrf.mxu0
        %v2506 = vpop.f32.mrf.mxu0
        %v2507 = vadd.f32 0.0, %v2506
        %v2508 = vpop.f32.mrf.mxu0
        %2509 = vmatprep.mubr.bf16.mxu0 %v2276
        %2510 = vmatmul.mubr.bf16.gmra.mxu0 %v2275
        %v2511 = vpop.f32.mrf.mxu0
        %v2512 = vadd.f32 0.0, %v2511
        %v2513 = vpop.f32.mrf.mxu0
        %v2514 = vpop.f32.mrf.mxu0
        %v2515 = vadd.f32 0.0, %v2514
        %v2516 = vpop.f32.mrf.mxu0
        %2517 = vmatprep.mubr.bf16.mxu0 %v2278
        %2518 = vmatmul.mubr.bf16.gmra.mxu0 %v2277
        %v2519 = vpop.f32.mrf.mxu0
        %v2520 = vadd.f32 0.0, %v2519
        %v2521 = vpop.f32.mrf.mxu0
        %v2522 = vpop.f32.mrf.mxu0
        %v2523 = vadd.f32 0.0, %v2522
        %v2524 = vpop.f32.mrf.mxu0
        %2525 = vmatprep.mubr.bf16.mxu0 %v2280
        %2526 = vmatmul.mubr.bf16.gmra.mxu0 %v2279
        %v2527 = vpop.f32.mrf.mxu0
        %v2528 = vadd.f32 0.0, %v2527
        %v2529 = vpop.f32.mrf.mxu0
        %v2530 = vpop.f32.mrf.mxu0
        %v2531 = vadd.f32 0.0, %v2530
        %v2532 = vpop.f32.mrf.mxu0
        %2533 = vmatprep.mubr.bf16.mxu0 %v2282
        %2534 = vmatmul.mubr.bf16.gmra.mxu0 %v2281
        %v2535 = vpop.f32.mrf.mxu0
        %v2536 = vadd.f32 0.0, %v2535
        %v2537 = vpop.f32.mrf.mxu0
        %v2538 = vpop.f32.mrf.mxu0
        %v2539 = vadd.f32 0.0, %v2538
        %v2540 = vpop.f32.mrf.mxu0
        %2541 = vmatprep.mubr.bf16.mxu0 %v2284
        %2542 = vmatmul.mubr.bf16.gmra.mxu0 %v2283
        %v2543 = vpop.f32.mrf.mxu0
        %v2544 = vadd.f32 0.0, %v2543
        %v2545 = vpop.f32.mrf.mxu0
        %v2546 = vpop.f32.mrf.mxu0
        %v2547 = vadd.f32 0.0, %v2546
        %v2548 = vpop.f32.mrf.mxu0
        %2549 = vmatprep.mubr.bf16.mxu0 %v2286
        %2550 = vmatmul.mubr.bf16.gmra.mxu0 %v2285
        %v2551 = vpop.f32.mrf.mxu0
        %v2552 = vadd.f32 0.0, %v2551
        %v2553 = vpop.f32.mrf.mxu0
        %v2554 = vpop.f32.mrf.mxu0
        %v2555 = vadd.f32 0.0, %v2554
        %v2556 = vpop.f32.mrf.mxu0
        %2557 = vmatprep.mubr.bf16.mxu0 %v2288
        %2558 = vmatmul.mubr.bf16.gmra.mxu0 %v2287
        %v2559 = vpop.f32.mrf.mxu0
        %v2560 = vadd.f32 0.0, %v2559
        %v2561 = vpop.f32.mrf.mxu0
        %v2562 = vpop.f32.mrf.mxu0
        %v2563 = vadd.f32 0.0, %v2562
        %v2564 = vpop.f32.mrf.mxu0
        %2565 = vmatprep.mubr.bf16.mxu0 %v2290
        %2566 = vmatmul.mubr.bf16.gmra.mxu0 %v2289
        %v2567 = vpop.f32.mrf.mxu0
        %v2568 = vadd.f32 0.0, %v2567
        %v2569 = vpop.f32.mrf.mxu0
        %v2570 = vpop.f32.mrf.mxu0
        %v2571 = vadd.f32 0.0, %v2570
        %v2572 = vpop.f32.mrf.mxu0
        %2573 = vmatprep.mubr.bf16.mxu0 %v2292
        %2574 = vmatmul.mubr.bf16.gmra.mxu0 %v2291
        %v2575 = vpop.f32.mrf.mxu0
        %v2576 = vadd.f32 0.0, %v2575
        %v2577 = vpop.f32.mrf.mxu0
        %v2578 = vpop.f32.mrf.mxu0
        %v2579 = vadd.f32 0.0, %v2578
        %v2580 = vpop.f32.mrf.mxu0
        %2581 = vdwg.mxu0
        %2582 = vst [vmem:[%s137] sm:$0xff] %v2456
        %2583 = vst [vmem:[%s137 + $0x8] sm:$0xff] %v2459
        %2584 = vst [vmem:[%s137 + $0x10] sm:$0xff] %v2464
        %2585 = vst [vmem:[%s137 + $0x18] sm:$0xff] %v2467
        %2586 = vst [vmem:[%s137 + $0x20] sm:$0xff] %v2472
        %2587 = vst [vmem:[%s137 + $0x28] sm:$0xff] %v2475
        %2588 = vst [vmem:[%s137 + $0x30] sm:$0xff] %v2480
        %2589 = vst [vmem:[%s137 + $0x38] sm:$0xff] %v2483
        %2590 = vst [vmem:[%s137 + $0x40] sm:$0xff] %v2488
        %2591 = vst [vmem:[%s137 + $0x48] sm:$0xff] %v2491
        %2592 = vst [vmem:[%s137 + $0x50] sm:$0xff] %v2496
        %2593 = vst [vmem:[%s137 + $0x58] sm:$0xff] %v2499
        %2594 = vst [vmem:[%s137 + $0x60] sm:$0xff] %v2504
        %2595 = vst [vmem:[%s137 + $0x68] sm:$0xff] %v2507
        %2596 = vst [vmem:[%s137 + $0x70] sm:$0xff] %v2512
        %2597 = vst [vmem:[%s137 + $0x78] sm:$0xff] %v2515
        %2598 = vst [vmem:[%s137 + $0x80] sm:$0xff] %v2520
        %2599 = vst [vmem:[%s137 + $0x88] sm:$0xff] %v2523
        %2600 = vst [vmem:[%s137 + $0x90] sm:$0xff] %v2528
        %2601 = vst [vmem:[%s137 + $0x98] sm:$0xff] %v2531
        %2602 = vst [vmem:[%s137 + $0xa0] sm:$0xff] %v2536
        %2603 = vst [vmem:[%s137 + $0xa8] sm:$0xff] %v2539
        %2604 = vst [vmem:[%s137 + $0xb0] sm:$0xff] %v2544
        %2605 = vst [vmem:[%s137 + $0xb8] sm:$0xff] %v2547
        %2606 = vst [vmem:[%s137 + $0xc0] sm:$0xff] %v2552
        %2607 = vst [vmem:[%s137 + $0xc8] sm:$0xff] %v2555
        %2608 = vst [vmem:[%s137 + $0xd0] sm:$0xff] %v2560
        %2609 = vst [vmem:[%s137 + $0xd8] sm:$0xff] %v2563
        %2610 = vst [vmem:[%s137 + $0xe0] sm:$0xff] %v2568
        %2611 = vst [vmem:[%s137 + $0xe8] sm:$0xff] %v2571
        %2612 = vst [vmem:[%s137 + $0xf0] sm:$0xff] %v2576
        %2613 = vst [vmem:[%s137 + $0xf8] sm:$0xff] %v2579
        %s2614 = sand.u32 %s71, 1
        %s2615 = scalar_lea.sflag [#allocation3], %s2614
        %s2616 = sand.u32 %s71, 1
        %s2617 = smul.addr %s2616, 256
        %s2618 = scalar_lea.vmem [#allocation2], %s2617
        // Predicated region
        $region29: #{tpu_custom_call.1} parent=27 // pred_check
          %p2619 = pneg %p81
        $region30: #{tpu_custom_call.1} parent=27 // pred_check_branch
          %2621 = sbr.rel (%p2619) target = $region32
        $region31: #{tpu_custom_call.1} parent=27 // pred_region
          %s2622 = smul.u32 32, %s16
          %s2624 = ssub.s32 4096, 4096
          %2625 = vsyncadd %s2615, %s2624
          %s2626 = smul.addr %s2622, 128
          %s2627 = scalar_lea.hbm %s2, %s2626
          %s2628 = sshll.u32 %s2618, 4
          %s2629 = int_to_ptr.vmem [resolvable:$true] %s2628
          %2634 = dma.vmem_to_hbm [thread:$0]  %s2629, 4096, %s2627, %s2615, 128, 128, 8
        $region32: #{tpu_custom_call.1} parent=27 // pred_fallthru
          _
      $region28: #{tpu_custom_call.1} parent=5 // pred_fallthru
        _
      %p2635 = scmp.le.s32.totalorder 2, %s11
      // Predicated region
      $region33: #{tpu_custom_call.1} parent=5 // pred_check
        %p2636 = pneg %p2635
      $region34: #{tpu_custom_call.1} parent=5 // pred_check_branch
        %2638 = sbr.rel (%p2636) target = $region36
      $region35: #{tpu_custom_call.1} parent=5 // pred_region
        %s2639 = ssub.s32 %s11, 2
        // Predicated region
        $region37: #{tpu_custom_call.1} parent=35 // pred_check
          %p2640 = pneg %p87
        $region38: #{tpu_custom_call.1} parent=35 // pred_check_branch
          %2642 = sbr.rel (%p2640) target = $region40
        $region39: #{tpu_custom_call.1} parent=35 // pred_region
          %s2643 = sand.u32 %s72, 1
          %s2644 = scalar_lea.sflag [#allocation3], %s2643
          %s2645 = sand.u32 %s72, 1
          %s2646 = smul.addr %s2645, 256
          %s2647 = scalar_lea.vmem [#allocation2], %s2646
          %2648 = dma.done %s2644, 4096
        $region40: #{tpu_custom_call.1} parent=35 // pred_fallthru
          _
      $region36: #{tpu_custom_call.1} parent=5 // pred_fallthru
        _
    $region6: #{tpu_custom_call.1} parent=1 // loop_footer
      %s15 = sadd.s32 1, %s11
    $region7: #{tpu_custom_call.1} parent=1 // loop_footer_branch
      %10 = sbr.rel target = $region3
    $region8: #{tpu_custom_call.1} parent=1 // loop_exit
      _
    %2649 = vsyncpa [#allocation3], 1
    %s2650 = scalar_lea.sflag [#allocation3], 1
    %2651 = vsyncpa %s2650, 1

</llo_original>
